<compile_context>
chip_gen: v6e
topology: v6e:2x2x1
jax: 0.10.0
libtpu: 0.0.40
codegen_flags: <defaults>
</compile_context>

<pallas_src>
import jax
import jax.numpy as jnp
from jax import lax
from jax.experimental import pallas as pl
from jax.experimental.pallas import tpu as pltpu


def _round_up(x, m):
    return ((x + m - 1) // m) * m


# ----------------------------------------------------------------------------
# Pallas kernel
# ----------------------------------------------------------------------------
def _make_kernel(n_layers, Bp, Hp, Vp, Op, seq_len, begin_idx):
    L = n_layers

    def kernel(*refs):
        emb_ref = refs[0]                              # (Vp, Hp)  bf16
        layer_refs = refs[1:1 + 3 * L]                 # per layer: w_x, w_hh (bf16), bias_term (f32)
        wdec_ref = refs[1 + 3 * L]                     # (Hp, Op)  bf16
        bdec_ref = refs[2 + 3 * L]                     # (Bp, Op)  f32  (-1e30 on pad cols)
        h0_ref = refs[3 + 3 * L]                       # (L, Bp, Hp) f32
        c0_ref = refs[4 + 3 * L]                       # (L, Bp, Hp) f32
        logits_ref, actions_ref, hT_ref, cT_ref = refs[5 + 3 * L: 9 + 3 * L]

        # Loop-invariant iota for the one-hot embedding lookup (built once).
        vocab_iota = lax.broadcasted_iota(jnp.int32, (Bp, Vp), 1)

        def body(t, carry):
            hs, cs, token = carry                      # hs/cs: tuples of (Bp, Hp); token (Bp, 1) int32
            # Embedding lookup as one-hot @ E (MXU friendly, avoids gather).
            onehot = jnp.where(vocab_iota == token, 1.0, 0.0).astype(jnp.bfloat16)
            inp = jnp.dot(onehot, emb_ref[...],
                          preferred_element_type=jnp.float32)      # (Bp, Hp) f32
            new_hs = []
            new_cs = []
            for l in range(L):
                w_x = layer_refs[3 * l][...]           # (Hp, 4Hp) bf16
                w_hh = layer_refs[3 * l + 1][...]      # (Hp, 4Hp) bf16
                bterm = layer_refs[3 * l + 2][...]     # (Bp, 4Hp) f32 (layer 0: props-term + bias)
                gates = (jnp.dot(inp.astype(jnp.bfloat16), w_x,
                                 preferred_element_type=jnp.float32)
                         + jnp.dot(hs[l].astype(jnp.bfloat16), w_hh,
                                   preferred_element_type=jnp.float32)
                         + bterm)
                i_g = jax.nn.sigmoid(gates[:, 0:Hp])
                f_g = jax.nn.sigmoid(gates[:, Hp:2 * Hp])
                g_g = jnp.tanh(gates[:, 2 * Hp:3 * Hp])
                o_g = jax.nn.sigmoid(gates[:, 3 * Hp:4 * Hp])
                c_new = f_g * cs[l] + i_g * g_g
                h_new = o_g * jnp.tanh(c_new)
                new_hs.append(h_new)
                new_cs.append(c_new)
                inp = h_new                            # inference: recurrent dropout disabled
            logits = jnp.dot(inp.astype(jnp.bfloat16), wdec_ref[...],
                             preferred_element_type=jnp.float32) + bdec_ref[...]
            logits_ref[t - 1] = logits
            # Greedy decode (sampling=False path); pad columns are -1e30 so they lose.
            action = jnp.argmax(logits, axis=-1).astype(jnp.int32)[:, None]   # (Bp, 1)
            actions_ref[t - 1] = action
            return tuple(new_hs), tuple(new_cs), action

        h_init = tuple(h0_ref[l] for l in range(L))
        c_init = tuple(c0_ref[l] for l in range(L))
        token0 = jnp.full((Bp, 1), begin_idx, dtype=jnp.int32)
        hs, cs, _ = lax.fori_loop(1, seq_len, body, (h_init, c_init, token0))
        for l in range(L):
            hT_ref[l] = hs[l]
            cT_ref[l] = cs[l]

    return kernel


# ----------------------------------------------------------------------------
# Wrapper (parameter packing: per-gate padding, bf16 cast, props hoist)
# ----------------------------------------------------------------------------
def _pad_gate_mat(w, H, Hp, in_dim, in_pad):
    """(4H, in_dim) gate-stacked weight -> per-gate padded, transposed (in_pad, 4Hp)."""
    blocks = []
    for g in range(4):
        blk = w[g * H:(g + 1) * H, :]
        blk = jnp.pad(blk, ((0, Hp - H), (0, in_pad - in_dim)))
        blocks.append(blk)
    return jnp.concatenate(blocks, axis=0).T           # (in_pad, 4Hp)


def _pad_gate_vec(v, H, Hp):
    """(..., 4H) -> (..., 4Hp), padding each gate block to Hp."""
    pads = [(0, 0)] * (v.ndim - 1) + [(0, Hp - H)]
    blocks = [jnp.pad(v[..., g * H:(g + 1) * H], pads) for g in range(4)]
    return jnp.concatenate(blocks, axis=-1)


def conditional_smiles_rnn_forward(params, properties, hidden, *, seq_len, begin_idx=1):
    h0, c0 = hidden
    n_layers, batch, H = h0.shape
    vocab = params["emb"].shape[0]
    out_size = params["w_dec"].shape[0]
    P = properties.shape[1]

    Bp = _round_up(batch, 8)
    Hp = _round_up(H, 128)
    Vp = _round_up(vocab, 128)
    Op = _round_up(out_size, 128)

    f32 = jnp.float32
    props = jnp.pad(properties.astype(f32), ((0, Bp - batch), (0, 0)))       # (Bp, P)

    ins = [jnp.pad(params["emb"], ((0, Vp - vocab), (0, Hp - H))).astype(jnp.bfloat16)]
    for l in range(n_layers):
        w_ih = params[f"w_ih_{l}"]                                           # (4H, in_l)
        w_hh = params[f"w_hh_{l}"]                                           # (4H, H)
        b = params[f"b_ih_{l}"] + params[f"b_hh_{l}"]                        # (4H,)
        b_pad = _pad_gate_vec(b, H, Hp)                                      # (4Hp,)
        if l == 0:
            w_x_raw = w_ih[:, :H]                                            # emb part
            w_p_raw = w_ih[:, H:H + P]                                       # props part
            # Hoisted: constant per-sequence props contribution + combined bias.
            props_gate = _pad_gate_vec(props[:, :P] @ w_p_raw.T, H, Hp)      # (Bp, 4Hp)
            bias_term = props_gate + b_pad[None, :]
        else:
            w_x_raw = w_ih
            bias_term = jnp.broadcast_to(b_pad[None, :], (Bp, 4 * Hp))
        ins += [
            _pad_gate_mat(w_x_raw, H, Hp, H, Hp).astype(jnp.bfloat16),       # (Hp, 4Hp)
            _pad_gate_mat(w_hh, H, Hp, H, Hp).astype(jnp.bfloat16),          # (Hp, 4Hp)
            bias_term.astype(f32),                                           # (Bp, 4Hp)
        ]

    wdec = jnp.pad(params["w_dec"], ((0, Op - out_size), (0, Hp - H))).T.astype(jnp.bfloat16)
    if Op > out_size:
        bdec_full = jnp.concatenate(
            [params["b_dec"].astype(f32), jnp.full((Op - out_size,), -1e30, f32)])
    else:
        bdec_full = params["b_dec"].astype(f32)
    bdec = jnp.broadcast_to(bdec_full[None, :], (Bp, Op))
    h0_p = jnp.pad(h0.astype(f32), ((0, 0), (0, Bp - batch), (0, Hp - H)))
    c0_p = jnp.pad(c0.astype(f32), ((0, 0), (0, Bp - batch), (0, Hp - H)))
    ins += [wdec, bdec, h0_p, c0_p]

    out_shapes = (
        jax.ShapeDtypeStruct((seq_len - 1, Bp, Op), f32),        # logits (time-major)
        jax.ShapeDtypeStruct((seq_len - 1, Bp, 1), jnp.int32),   # greedy actions
        jax.ShapeDtypeStruct((n_layers, Bp, Hp), f32),           # h_T
        jax.ShapeDtypeStruct((n_layers, Bp, Hp), f32),           # c_T
    )

    # VMEM budget: footprint-derived, clamped (v5e/v6e have 128 MiB; keep <=100 MiB).
    total_bytes = sum(int(a.size) * a.dtype.itemsize for a in ins)
    total_bytes += sum(int(jnp.prod(jnp.array(s.shape))) * jnp.dtype(s.dtype).itemsize
                       for s in out_shapes)
    vmem_limit = int(min(max(2 * total_bytes + (4 << 20), 32 << 20), 100 << 20))

    kernel = _make_kernel(n_layers, Bp, Hp, Vp, Op, seq_len, begin_idx)
    vmem = pl.BlockSpec(memory_space=pltpu.MemorySpace.VMEM)
    logits_tm, actions_tm, hT_p, cT_p = pl.pallas_call(
        kernel,
        out_shape=out_shapes,
        in_specs=[vmem] * len(ins),
        out_specs=(vmem, vmem, vmem, vmem),
        compiler_params=pltpu.CompilerParams(vmem_limit_bytes=vmem_limit),
    )(*ins)

    # Unpad / reorder outside the kernel (batch_first convention of the module).
    outputs = jnp.transpose(logits_tm, (1, 0, 2))[:batch, :, :out_size]   # (B, T-1, O)
    actions = jnp.transpose(actions_tm[:, :batch, 0], (1, 0))             # (B, T-1)
    hT = hT_p[:, :batch, :H]
    cT = cT_p[:, :batch, :H]
    return outputs, actions, (hT, cT)


# ----------------------------------------------------------------------------
# Deterministic parameter init mirroring ConditionalSmilesRnn.init_weights
# ----------------------------------------------------------------------------
def _xavier_uniform(key, shape):
    fan_out, fan_in = shape[0], shape[1]
    bound = (6.0 / (fan_in + fan_out)) ** 0.5
    return jax.random.uniform(key, shape, jnp.float32, -bound, bound)


def _orthogonal(key, shape):
    rows, cols = shape
    a = jax.random.normal(key, (rows, cols) if rows >= cols else (cols, rows), jnp.float32)
    q, r = jnp.linalg.qr(a)
    q = q * jnp.sign(jnp.diagonal(r))
    return q if rows >= cols else q.T


def init_params(key, input_size, property_size, hidden_size, output_size, n_layers):
    H = hidden_size
    keys = jax.random.split(key, 2 + 2 * n_layers)
    params = {
        "emb": _xavier_uniform(keys[0], (input_size, H)),      # nn.Embedding weight
        "w_dec": _xavier_uniform(keys[1], (output_size, H)),   # nn.Linear weight
        "b_dec": jnp.zeros((output_size,), jnp.float32),
    }
    for l in range(n_layers):
        in_l = H + property_size if l == 0 else H
        params[f"w_ih_{l}"] = _orthogonal(keys[2 + 2 * l], (4 * H, in_l))
        params[f"w_hh_{l}"] = _orthogonal(keys[3 + 2 * l], (4 * H, H))
        # bias = 0, forget-gate quarter (second quarter, PyTorch i,f,g,o order) = 1
        b = jnp.zeros((4 * H,), jnp.float32).at[H:2 * H].set(1.0)
        params[f"b_ih_{l}"] = b
        params[f"b_hh_{l}"] = b
    return params


def init_hidden(n_layers, bsz, hidden_size):
    z = jnp.zeros((n_layers, bsz, hidden_size), jnp.float32)
    return z, z


# ----------------------------------------------------------------------------
if __name__ == "__main__":
    input_size = 16     # vocab
    property_size = 8
    hidden_size = 32
    output_size = 16
    n_layers = 2
    batch = 4
    seq_len = 8
    begin_idx = 1       # SmilesCharDictionary().begin_idx

    key = jax.random.PRNGKey(0)
    pkey, prop_key = jax.random.split(key)
    params = init_params(pkey, input_size, property_size, hidden_size, output_size, n_layers)
    properties = jax.random.normal(prop_key, (batch, property_size), jnp.float32)
    hidden = init_hidden(n_layers, batch, hidden_size)

    outputs, actions, (hT, cT) = conditional_smiles_rnn_forward(
        params, properties, hidden, seq_len=seq_len, begin_idx=begin_idx)

    jax.block_until_ready((outputs, actions, hT, cT))
    assert outputs.shape == (batch, seq_len - 1, output_size)
    assert actions.shape == (batch, seq_len - 1)
    assert hT.shape == (n_layers, batch, hidden_size)
    assert cT.shape == (n_layers, batch, hidden_size)
    print("KERNEL_OK")
</pallas_src>

<mosaic_0001>
module attributes {stable_mosaic.version = 11 : i64} {
  func.func @kernel(%arg0: memref<128x128xbf16, #tpu.memory_space<vmem>>, %arg1: memref<128x512xbf16, #tpu.memory_space<vmem>>, %arg2: memref<128x512xbf16, #tpu.memory_space<vmem>>, %arg3: memref<8x512xf32, #tpu.memory_space<vmem>>, %arg4: memref<128x512xbf16, #tpu.memory_space<vmem>>, %arg5: memref<128x512xbf16, #tpu.memory_space<vmem>>, %arg6: memref<8x512xf32, #tpu.memory_space<vmem>>, %arg7: memref<128x128xbf16, #tpu.memory_space<vmem>>, %arg8: memref<8x128xf32, #tpu.memory_space<vmem>>, %arg9: memref<2x8x128xf32, #tpu.memory_space<vmem>>, %arg10: memref<2x8x128xf32, #tpu.memory_space<vmem>>, %arg11: memref<7x8x128xf32, #tpu.memory_space<vmem>>, %arg12: memref<7x8x1xi32, #tpu.memory_space<vmem>>, %arg13: memref<2x8x128xf32, #tpu.memory_space<vmem>>, %arg14: memref<2x8x128xf32, #tpu.memory_space<vmem>>) attributes {dimension_semantics = [], scalar_prefetch = 0 : i64, scratch_operands = 0 : i64, tpu.core_type = #tpu.core_type<tc>} {
    %0 = tpu.iota {dimensions = array<i32: 1>} : vector<8x128xi32>
    %c0 = arith.constant 0 : index
    %c0_0 = arith.constant 0 : index
    %c0_1 = arith.constant 0 : index
    %1 = vector.load %arg9[%c0, %c0_0, %c0_1] : memref<2x8x128xf32, #tpu.memory_space<vmem>>, vector<1x8x128xf32>
    %2 = vector.shape_cast %1 : vector<1x8x128xf32> to vector<8x128xf32>
    %c1 = arith.constant 1 : index
    %c0_2 = arith.constant 0 : index
    %c0_3 = arith.constant 0 : index
    %3 = vector.load %arg9[%c1, %c0_2, %c0_3] : memref<2x8x128xf32, #tpu.memory_space<vmem>>, vector<1x8x128xf32>
    %4 = vector.shape_cast %3 : vector<1x8x128xf32> to vector<8x128xf32>
    %c0_4 = arith.constant 0 : index
    %c0_5 = arith.constant 0 : index
    %c0_6 = arith.constant 0 : index
    %5 = vector.load %arg10[%c0_4, %c0_5, %c0_6] : memref<2x8x128xf32, #tpu.memory_space<vmem>>, vector<1x8x128xf32>
    %6 = vector.shape_cast %5 : vector<1x8x128xf32> to vector<8x128xf32>
    %c1_7 = arith.constant 1 : index
    %c0_8 = arith.constant 0 : index
    %c0_9 = arith.constant 0 : index
    %7 = vector.load %arg10[%c1_7, %c0_8, %c0_9] : memref<2x8x128xf32, #tpu.memory_space<vmem>>, vector<1x8x128xf32>
    %8 = vector.shape_cast %7 : vector<1x8x128xf32> to vector<8x128xf32>
    %c1_i32 = arith.constant 1 : i32
    %9 = vector.broadcast %c1_i32 : i32 to vector<8x1xi32>
    %c1_i32_10 = arith.constant 1 : i32
    %c7_i32 = arith.constant 7 : i32
    %10 = arith.addi %c1_i32_10, %c7_i32 : i32
    %c1_i32_11 = arith.constant 1 : i32
    %11:5 = scf.for %arg15 = %c1_i32_10 to %10 step %c1_i32_11 iter_args(%arg16 = %2, %arg17 = %4, %arg18 = %6, %arg19 = %8, %arg20 = %9) -> (vector<8x128xf32>, vector<8x128xf32>, vector<8x128xf32>, vector<8x128xf32>, vector<8x1xi32>)  : i32 {
      %24 = vector.broadcast %arg20 : vector<8x1xi32> to vector<8x128xi32>
      %25 = arith.cmpi eq, %0, %24 : vector<8x128xi32>
      %cst = arith.constant 1.000000e+00 : f32
      %cst_25 = arith.constant 0.000000e+00 : f32
      %26 = vector.broadcast %cst : f32 to vector<8x128xf32>
      %27 = vector.broadcast %cst_25 : f32 to vector<8x128xf32>
      %28 = arith.select %25, %26, %27 : vector<8x128xi1>, vector<8x128xf32>
      %29 = arith.truncf %28 : vector<8x128xf32> to vector<8x128xbf16>
      %c0_26 = arith.constant 0 : index
      %c0_27 = arith.constant 0 : index
      %30 = vector.load %arg0[%c0_26, %c0_27] : memref<128x128xbf16, #tpu.memory_space<vmem>>, vector<128x128xbf16>
      %cst_28 = arith.constant dense<0.000000e+00> : vector<8x128xf32>
      %31 = tpu.matmul %29, %30, %cst_28 {dimension_numbers = #tpu.dot_dimension_numbers<[1], [0], [0], [1], [0, 0, 1, 1], [], []>} : vector<8x128xbf16>, vector<128x128xbf16>, vector<8x128xf32> -> vector<8x128xf32>
      %c0_29 = arith.constant 0 : index
      %c0_30 = arith.constant 0 : index
      %32 = vector.load %arg1[%c0_29, %c0_30] : memref<128x512xbf16, #tpu.memory_space<vmem>>, vector<128x512xbf16>
      %c0_31 = arith.constant 0 : index
      %c0_32 = arith.constant 0 : index
      %33 = vector.load %arg2[%c0_31, %c0_32] : memref<128x512xbf16, #tpu.memory_space<vmem>>, vector<128x512xbf16>
      %c0_33 = arith.constant 0 : index
      %c0_34 = arith.constant 0 : index
      %34 = vector.load %arg3[%c0_33, %c0_34] : memref<8x512xf32, #tpu.memory_space<vmem>>, vector<8x512xf32>
      %35 = arith.truncf %31 : vector<8x128xf32> to vector<8x128xbf16>
      %cst_35 = arith.constant dense<0.000000e+00> : vector<8x512xf32>
      %36 = tpu.matmul %35, %32, %cst_35 {dimension_numbers = #tpu.dot_dimension_numbers<[1], [0], [0], [1], [0, 0, 1, 1], [], []>} : vector<8x128xbf16>, vector<128x512xbf16>, vector<8x512xf32> -> vector<8x512xf32>
      %37 = arith.truncf %arg16 : vector<8x128xf32> to vector<8x128xbf16>
      %cst_36 = arith.constant dense<0.000000e+00> : vector<8x512xf32>
      %38 = tpu.matmul %37, %33, %cst_36 {dimension_numbers = #tpu.dot_dimension_numbers<[1], [0], [0], [1], [0, 0, 1, 1], [], []>} : vector<8x128xbf16>, vector<128x512xbf16>, vector<8x512xf32> -> vector<8x512xf32>
      %39 = arith.addf %36, %38 : vector<8x512xf32>
      %40 = arith.addf %39, %34 : vector<8x512xf32>
      %41 = vector.extract_strided_slice %40 {offsets = [0, 0], sizes = [8, 128], strides = [1, 1]} : vector<8x512xf32> to vector<8x128xf32>
      %42 = arith.negf %41 : vector<8x128xf32>
      %43 = math.exp %42 : vector<8x128xf32>
      %cst_37 = arith.constant 1.000000e+00 : f32
      %44 = vector.broadcast %cst_37 : f32 to vector<8x128xf32>
      %45 = arith.addf %44, %43 : vector<8x128xf32>
      %46 = arith.divf %44, %45 : vector<8x128xf32>
      %47 = vector.extract_strided_slice %40 {offsets = [0, 128], sizes = [8, 128], strides = [1, 1]} : vector<8x512xf32> to vector<8x128xf32>
      %48 = arith.negf %47 : vector<8x128xf32>
      %49 = math.exp %48 : vector<8x128xf32>
      %cst_38 = arith.constant 1.000000e+00 : f32
      %50 = vector.broadcast %cst_38 : f32 to vector<8x128xf32>
      %51 = arith.addf %50, %49 : vector<8x128xf32>
      %52 = arith.divf %50, %51 : vector<8x128xf32>
      %53 = vector.extract_strided_slice %40 {offsets = [0, 256], sizes = [8, 128], strides = [1, 1]} : vector<8x512xf32> to vector<8x128xf32>
      %54 = math.tanh %53 : vector<8x128xf32>
      %55 = vector.extract_strided_slice %40 {offsets = [0, 384], sizes = [8, 128], strides = [1, 1]} : vector<8x512xf32> to vector<8x128xf32>
      %56 = arith.negf %55 : vector<8x128xf32>
      %57 = math.exp %56 : vector<8x128xf32>
      %cst_39 = arith.constant 1.000000e+00 : f32
      %58 = vector.broadcast %cst_39 : f32 to vector<8x128xf32>
      %59 = arith.addf %58, %57 : vector<8x128xf32>
      %60 = arith.divf %58, %59 : vector<8x128xf32>
      %61 = arith.mulf %52, %arg18 : vector<8x128xf32>
      %62 = arith.mulf %46, %54 : vector<8x128xf32>
      %63 = arith.addf %61, %62 : vector<8x128xf32>
      %64 = math.tanh %63 : vector<8x128xf32>
      %65 = arith.mulf %60, %64 : vector<8x128xf32>
      %c0_40 = arith.constant 0 : index
      %c0_41 = arith.constant 0 : index
      %66 = vector.load %arg4[%c0_40, %c0_41] : memref<128x512xbf16, #tpu.memory_space<vmem>>, vector<128x512xbf16>
      %c0_42 = arith.constant 0 : index
      %c0_43 = arith.constant 0 : index
      %67 = vector.load %arg5[%c0_42, %c0_43] : memref<128x512xbf16, #tpu.memory_space<vmem>>, vector<128x512xbf16>
      %c0_44 = arith.constant 0 : index
      %c0_45 = arith.constant 0 : index
      %68 = vector.load %arg6[%c0_44, %c0_45] : memref<8x512xf32, #tpu.memory_space<vmem>>, vector<8x512xf32>
      %69 = arith.truncf %65 : vector<8x128xf32> to vector<8x128xbf16>
      %cst_46 = arith.constant dense<0.000000e+00> : vector<8x512xf32>
      %70 = tpu.matmul %69, %66, %cst_46 {dimension_numbers = #tpu.dot_dimension_numbers<[1], [0], [0], [1], [0, 0, 1, 1], [], []>} : vector<8x128xbf16>, vector<128x512xbf16>, vector<8x512xf32> -> vector<8x512xf32>
      %71 = arith.truncf %arg17 : vector<8x128xf32> to vector<8x128xbf16>
      %cst_47 = arith.constant dense<0.000000e+00> : vector<8x512xf32>
      %72 = tpu.matmul %71, %67, %cst_47 {dimension_numbers = #tpu.dot_dimension_numbers<[1], [0], [0], [1], [0, 0, 1, 1], [], []>} : vector<8x128xbf16>, vector<128x512xbf16>, vector<8x512xf32> -> vector<8x512xf32>
      %73 = arith.addf %70, %72 : vector<8x512xf32>
      %74 = arith.addf %73, %68 : vector<8x512xf32>
      %75 = vector.extract_strided_slice %74 {offsets = [0, 0], sizes = [8, 128], strides = [1, 1]} : vector<8x512xf32> to vector<8x128xf32>
      %76 = arith.negf %75 : vector<8x128xf32>
      %77 = math.exp %76 : vector<8x128xf32>
      %cst_48 = arith.constant 1.000000e+00 : f32
      %78 = vector.broadcast %cst_48 : f32 to vector<8x128xf32>
      %79 = arith.addf %78, %77 : vector<8x128xf32>
      %80 = arith.divf %78, %79 : vector<8x128xf32>
      %81 = vector.extract_strided_slice %74 {offsets = [0, 128], sizes = [8, 128], strides = [1, 1]} : vector<8x512xf32> to vector<8x128xf32>
      %82 = arith.negf %81 : vector<8x128xf32>
      %83 = math.exp %82 : vector<8x128xf32>
      %cst_49 = arith.constant 1.000000e+00 : f32
      %84 = vector.broadcast %cst_49 : f32 to vector<8x128xf32>
      %85 = arith.addf %84, %83 : vector<8x128xf32>
      %86 = arith.divf %84, %85 : vector<8x128xf32>
      %87 = vector.extract_strided_slice %74 {offsets = [0, 256], sizes = [8, 128], strides = [1, 1]} : vector<8x512xf32> to vector<8x128xf32>
      %88 = math.tanh %87 : vector<8x128xf32>
      %89 = vector.extract_strided_slice %74 {offsets = [0, 384], sizes = [8, 128], strides = [1, 1]} : vector<8x512xf32> to vector<8x128xf32>
      %90 = arith.negf %89 : vector<8x128xf32>
      %91 = math.exp %90 : vector<8x128xf32>
      %cst_50 = arith.constant 1.000000e+00 : f32
      %92 = vector.broadcast %cst_50 : f32 to vector<8x128xf32>
      %93 = arith.addf %92, %91 : vector<8x128xf32>
      %94 = arith.divf %92, %93 : vector<8x128xf32>
      %95 = arith.mulf %86, %arg19 : vector<8x128xf32>
      %96 = arith.mulf %80, %88 : vector<8x128xf32>
      %97 = arith.addf %95, %96 : vector<8x128xf32>
      %98 = math.tanh %97 : vector<8x128xf32>
      %99 = arith.mulf %94, %98 : vector<8x128xf32>
      %100 = arith.truncf %99 : vector<8x128xf32> to vector<8x128xbf16>
      %c0_51 = arith.constant 0 : index
      %c0_52 = arith.constant 0 : index
      %101 = vector.load %arg7[%c0_51, %c0_52] : memref<128x128xbf16, #tpu.memory_space<vmem>>, vector<128x128xbf16>
      %cst_53 = arith.constant dense<0.000000e+00> : vector<8x128xf32>
      %102 = tpu.matmul %100, %101, %cst_53 {dimension_numbers = #tpu.dot_dimension_numbers<[1], [0], [0], [1], [0, 0, 1, 1], [], []>} : vector<8x128xbf16>, vector<128x128xbf16>, vector<8x128xf32> -> vector<8x128xf32>
      %c0_54 = arith.constant 0 : index
      %c0_55 = arith.constant 0 : index
      %103 = vector.load %arg8[%c0_54, %c0_55] : memref<8x128xf32, #tpu.memory_space<vmem>>, vector<8x128xf32>
      %104 = arith.addf %102, %103 : vector<8x128xf32>
      %c1_i32_56 = arith.constant 1 : i32
      %105 = arith.subi %arg15, %c1_i32_56 : i32
      %106 = arith.index_cast %105 : i32 to index
      %c0_57 = arith.constant 0 : index
      %c0_58 = arith.constant 0 : index
      %107 = vector.load %arg11[%106, %c0_57, %c0_58] : memref<7x8x128xf32, #tpu.memory_space<vmem>>, vector<1x8x128xf32>
      %108 = vector.shape_cast %107 : vector<1x8x128xf32> to vector<8x128xf32>
      %109 = vector.shape_cast %104 : vector<8x128xf32> to vector<1x8x128xf32>
      tpu.vector_store %arg11[%106, %c0_57, %c0_58], %109 {strides = array<i32>} : memref<7x8x128xf32, #tpu.memory_space<vmem>>, vector<1x8x128xf32>,
      %110 = tpu.reduce_index %104 {axis = 1 : i32, kind = #tpu.reduction_kind<arg_max>} : vector<8x128xf32> -> vector<8xi32>
      %111 = vector.shape_cast %110 : vector<8xi32> to vector<8x1xi32>
      %c1_i32_59 = arith.constant 1 : i32
      %112 = arith.subi %arg15, %c1_i32_59 : i32
      %113 = arith.index_cast %112 : i32 to index
      %c0_60 = arith.constant 0 : index
      %c0_61 = arith.constant 0 : index
      %114 = vector.load %arg12[%113, %c0_60, %c0_61] : memref<7x8x1xi32, #tpu.memory_space<vmem>>, vector<1x8x1xi32>
      %115 = vector.shape_cast %114 : vector<1x8x1xi32> to vector<8x1xi32>
      %116 = vector.shape_cast %111 : vector<8x1xi32> to vector<1x8x1xi32>
      tpu.vector_store %arg12[%113, %c0_60, %c0_61], %116 {strides = array<i32>} : memref<7x8x1xi32, #tpu.memory_space<vmem>>, vector<1x8x1xi32>,
      scf.yield %65, %99, %63, %97, %111 : vector<8x128xf32>, vector<8x128xf32>, vector<8x128xf32>, vector<8x128xf32>, vector<8x1xi32>
    }
    %c7_i32_12 = arith.constant 7 : i32
    %c0_13 = arith.constant 0 : index
    %c0_14 = arith.constant 0 : index
    %c0_15 = arith.constant 0 : index
    %12 = vector.load %arg13[%c0_13, %c0_14, %c0_15] : memref<2x8x128xf32, #tpu.memory_space<vmem>>, vector<1x8x128xf32>
    %13 = vector.shape_cast %12 : vector<1x8x128xf32> to vector<8x128xf32>
    %14 = vector.shape_cast %11#0 : vector<8x128xf32> to vector<1x8x128xf32>
    tpu.vector_store %arg13[%c0_13, %c0_14, %c0_15], %14 {strides = array<i32>} : memref<2x8x128xf32, #tpu.memory_space<vmem>>, vector<1x8x128xf32>,
    %c0_16 = arith.constant 0 : index
    %c0_17 = arith.constant 0 : index
    %c0_18 = arith.constant 0 : index
    %15 = vector.load %arg14[%c0_16, %c0_17, %c0_18] : memref<2x8x128xf32, #tpu.memory_space<vmem>>, vector<1x8x128xf32>
    %16 = vector.shape_cast %15 : vector<1x8x128xf32> to vector<8x128xf32>
    %17 = vector.shape_cast %11#2 : vector<8x128xf32> to vector<1x8x128xf32>
    tpu.vector_store %arg14[%c0_16, %c0_17, %c0_18], %17 {strides = array<i32>} : memref<2x8x128xf32, #tpu.memory_space<vmem>>, vector<1x8x128xf32>,
    %c1_19 = arith.constant 1 : index
    %c0_20 = arith.constant 0 : index
    %c0_21 = arith.constant 0 : index
    %18 = vector.load %arg13[%c1_19, %c0_20, %c0_21] : memref<2x8x128xf32, #tpu.memory_space<vmem>>, vector<1x8x128xf32>
    %19 = vector.shape_cast %18 : vector<1x8x128xf32> to vector<8x128xf32>
    %20 = vector.shape_cast %11#1 : vector<8x128xf32> to vector<1x8x128xf32>
    tpu.vector_store %arg13[%c1_19, %c0_20, %c0_21], %20 {strides = array<i32>} : memref<2x8x128xf32, #tpu.memory_space<vmem>>, vector<1x8x128xf32>,
    %c1_22 = arith.constant 1 : index
    %c0_23 = arith.constant 0 : index
    %c0_24 = arith.constant 0 : index
    %21 = vector.load %arg14[%c1_22, %c0_23, %c0_24] : memref<2x8x128xf32, #tpu.memory_space<vmem>>, vector<1x8x128xf32>
    %22 = vector.shape_cast %21 : vector<1x8x128xf32> to vector<8x128xf32>
    %23 = vector.shape_cast %11#3 : vector<8x128xf32> to vector<1x8x128xf32>
    tpu.vector_store %arg14[%c1_22, %c0_23, %c0_24], %23 {strides = array<i32>} : memref<2x8x128xf32, #tpu.memory_space<vmem>>, vector<1x8x128xf32>,
    return
  }
}

</mosaic_0001>

<llo_original>
// kernel: tpu_custom_call.1
$region0: #{tpu_custom_call.1}
  #allocation0 [shape = 'u32[]', space=smem, size = 0x4, offset = 0x4, fixed_abs, tag = 'smem constant byte address 0x4 - core index']
  #allocation1 [shape = 'u32[144,128]{1,0:T(1,128)}', space=vmem, size = 0x12000, scoped, tag = 'internal scratch']
  %s0 = inlined_call_operand.hbm [shape: bf16[128,128], index: 0, kind: input, shape index: {}]
  %s1 = inlined_call_operand.hbm [shape: bf16[128,512], index: 1, kind: input, shape index: {}]
  %s2 = inlined_call_operand.hbm [shape: bf16[128,512], index: 2, kind: input, shape index: {}]
  %s3 = inlined_call_operand.hbm [shape: f32[8,512], index: 3, kind: input, shape index: {}]
  %s4 = inlined_call_operand.hbm [shape: bf16[128,512], index: 4, kind: input, shape index: {}]
  %s5 = inlined_call_operand.hbm [shape: bf16[128,512], index: 5, kind: input, shape index: {}]
  %s6 = inlined_call_operand.hbm [shape: f32[8,512], index: 6, kind: input, shape index: {}]
  %s7 = inlined_call_operand.hbm [shape: bf16[128,128], index: 7, kind: input, shape index: {}]
  %s8 = inlined_call_operand.hbm [shape: f32[8,128], index: 8, kind: input, shape index: {}]
  %s9 = inlined_call_operand.vmem [shape: f32[2,8,128], index: 9, kind: input, shape index: {}]
  %s10 = inlined_call_operand.hbm [shape: f32[2,8,128], index: 10, kind: input, shape index: {}]
  %s11 = inlined_call_operand.hbm [shape: f32[7,8,128], index: 11, kind: output, shape index: {0}]
  %s12 = inlined_call_operand.vmem [shape: s32[7,8,1], index: 12, kind: output, shape index: {1}]
  %s13 = inlined_call_operand.hbm [shape: f32[2,8,128], index: 13, kind: output, shape index: {2}]
  %s14 = inlined_call_operand.hbm [shape: f32[2,8,128], index: 14, kind: output, shape index: {3}]
  %15 = xla_tuple %s11, %s12, %s13, %s14
  %s16 = sld [smem:[#allocation0]]
  $region125: #{tpu_custom_call.1} parent=0
    _
  %s18 = ssub.s32 1, %s16
  %s19 = scalar_select 0, %s18, %s16
  $region1: #{tpu_custom_call.1} parent=0
    #allocation2 [shape = 'u8[32768]{0}', space=vmem, size = 0x8000, scoped, tag = 'input window, operand 0, single buffered']
    #allocation3 [shape = 's32[1]{0}', space=sflag, size = 0x4, scoped, tag = 'scoped memory for tpu_custom_call.1']
    #allocation4 [shape = 's32[1]{0}', space=sflag, size = 0x4, scoped, tag = 'scoped memory for tpu_custom_call.1']
    #allocation5 [shape = 'u8[131072]{0}', space=vmem, size = 0x20000, scoped, tag = 'input window, operand 1, single buffered']
    #allocation6 [shape = 's32[1]{0}', space=sflag, size = 0x4, scoped, tag = 'scoped memory for tpu_custom_call.1']
    #allocation7 [shape = 'u8[131072]{0}', space=vmem, size = 0x20000, scoped, tag = 'input window, operand 2, single buffered']
    #allocation8 [shape = 'u8[16384]{0}', space=vmem, size = 0x4000, scoped, tag = 'input window, operand 3, single buffered']
    #allocation9 [shape = 's32[1]{0}', space=sflag, size = 0x4, scoped, tag = 'scoped memory for tpu_custom_call.1']
    #allocation10 [shape = 'u8[131072]{0}', space=vmem, size = 0x20000, scoped, tag = 'input window, operand 4, single buffered']
    #allocation11 [shape = 'u8[131072]{0}', space=vmem, size = 0x20000, scoped, tag = 'input window, operand 5, single buffered']
    #allocation12 [shape = 's32[1]{0}', space=sflag, size = 0x4, scoped, tag = 'scoped memory for tpu_custom_call.1']
    #allocation13 [shape = 'u8[16384]{0}', space=vmem, size = 0x4000, scoped, tag = 'input window, operand 6, single buffered']
    #allocation14 [shape = 'u8[32768]{0}', space=vmem, size = 0x8000, scoped, tag = 'input window, operand 7, single buffered']
    #allocation15 [shape = 's32[1]{0}', space=sflag, size = 0x4, scoped, tag = 'scoped memory for tpu_custom_call.1']
    #allocation16 [shape = 'u8[4096]{0}', space=vmem, size = 0x1000, scoped, tag = 'input window, operand 8, single buffered']
    #allocation17 [shape = 'u8[8192]{0}', space=vmem, size = 0x2000, scoped, tag = 'input window, operand 10, single buffered']
    #allocation18 [shape = 's32[1]{0}', space=sflag, size = 0x4, scoped, tag = 'scoped memory for tpu_custom_call.1']
    #allocation19 [shape = 'u8[28672]{0}', space=vmem, size = 0x7000, scoped, tag = 'output window, operand 0, single buffered']
    #allocation20 [shape = 'u8[8192]{0}', space=vmem, size = 0x2000, scoped, tag = 'output window, operand 2, single buffered']
    #allocation21 [shape = 's32[1]{0}', space=sflag, size = 0x4, scoped, tag = 'scoped memory for tpu_custom_call.1']
    #allocation22 [shape = 'u8[8192]{0}', space=vmem, size = 0x2000, scoped, tag = 'output window, operand 3, single buffered']
    %20 = vsyncpa [#allocation3], 0
    %21 = vsyncpa [#allocation6], 0
    %22 = vsyncpa [#allocation9], 0
    %23 = vsyncpa [#allocation12], 0
    %24 = vsyncpa [#allocation15], 0
    %25 = vsyncpa [#allocation18], 0
    %26 = vsyncpa [#allocation4], 0
    %27 = vsyncpa [#allocation21], 0
    // Predicated region
    $region2: #{tpu_custom_call.1} parent=1 // pred_check
      _
    $region3: #{tpu_custom_call.1} parent=1 // pred_check_branch
      %29 = sbr.rel (0) target = $region5
    $region4: #{tpu_custom_call.1} parent=1 // pred_region
      %s31 = ssub.s32 1024, 1024
      %32 = vsyncadd [#allocation3], %s31
      %s33 = sshll.u32 [#allocation2], 4
      %s34 = int_to_ptr.vmem [resolvable:$true] %s33
      %39 = dma.hbm_to_vmem [thread:$0]  %s0, 1024, %s34, [#allocation3], 64, 64, 4
    $region5: #{tpu_custom_call.1} parent=1 // pred_fallthru
      _
    // Predicated region
    $region6: #{tpu_custom_call.1} parent=1 // pred_check
      _
    $region7: #{tpu_custom_call.1} parent=1 // pred_check_branch
      %41 = sbr.rel (0) target = $region9
    $region8: #{tpu_custom_call.1} parent=1 // pred_region
      %s43 = ssub.s32 4096, 4096
      %44 = vsyncadd [#allocation6], %s43
      %s45 = sshll.u32 [#allocation5], 4
      %s46 = int_to_ptr.vmem [resolvable:$true] %s45
      %51 = dma.hbm_to_vmem [thread:$0]  %s1, 4096, %s46, [#allocation6], 256, 256, 16
    $region9: #{tpu_custom_call.1} parent=1 // pred_fallthru
      _
    // Predicated region
    $region10: #{tpu_custom_call.1} parent=1 // pred_check
      _
    $region11: #{tpu_custom_call.1} parent=1 // pred_check_branch
      %53 = sbr.rel (0) target = $region13
    $region12: #{tpu_custom_call.1} parent=1 // pred_region
      %s55 = ssub.s32 4096, 4096
      %56 = vsyncadd [#allocation6], %s55
      %s57 = sshll.u32 [#allocation7], 4
      %s58 = int_to_ptr.vmem [resolvable:$true] %s57
      %63 = dma.hbm_to_vmem [thread:$0]  %s2, 4096, %s58, [#allocation6], 256, 256, 16
    $region13: #{tpu_custom_call.1} parent=1 // pred_fallthru
      _
    // Predicated region
    $region14: #{tpu_custom_call.1} parent=1 // pred_check
      _
    $region15: #{tpu_custom_call.1} parent=1 // pred_check_branch
      %65 = sbr.rel (0) target = $region17
    $region16: #{tpu_custom_call.1} parent=1 // pred_region
      %s67 = ssub.s32 512, 512
      %68 = vsyncadd [#allocation9], %s67
      %s70 = sshll.u32 [#allocation8], 4
      %s71 = int_to_ptr.vmem [resolvable:$true] %s70
      %73 = dma.hbm_to_vmem [thread:$0]  %s3, 512, %s71, [#allocation9]
    $region17: #{tpu_custom_call.1} parent=1 // pred_fallthru
      _
    // Predicated region
    $region18: #{tpu_custom_call.1} parent=1 // pred_check
      _
    $region19: #{tpu_custom_call.1} parent=1 // pred_check_branch
      %75 = sbr.rel (0) target = $region21
    $region20: #{tpu_custom_call.1} parent=1 // pred_region
      %s77 = ssub.s32 4096, 4096
      %78 = vsyncadd [#allocation9], %s77
      %s79 = sshll.u32 [#allocation10], 4
      %s80 = int_to_ptr.vmem [resolvable:$true] %s79
      %85 = dma.hbm_to_vmem [thread:$0]  %s4, 4096, %s80, [#allocation9], 256, 256, 16
    $region21: #{tpu_custom_call.1} parent=1 // pred_fallthru
      _
    // Predicated region
    $region22: #{tpu_custom_call.1} parent=1 // pred_check
      _
    $region23: #{tpu_custom_call.1} parent=1 // pred_check_branch
      %87 = sbr.rel (0) target = $region25
    $region24: #{tpu_custom_call.1} parent=1 // pred_region
      %s89 = ssub.s32 4096, 4096
      %90 = vsyncadd [#allocation12], %s89
      %s91 = sshll.u32 [#allocation11], 4
      %s92 = int_to_ptr.vmem [resolvable:$true] %s91
      %97 = dma.hbm_to_vmem [thread:$0]  %s5, 4096, %s92, [#allocation12], 256, 256, 16
    $region25: #{tpu_custom_call.1} parent=1 // pred_fallthru
      _
    // Predicated region
    $region26: #{tpu_custom_call.1} parent=1 // pred_check
      _
    $region27: #{tpu_custom_call.1} parent=1 // pred_check_branch
      %99 = sbr.rel (0) target = $region29
    $region28: #{tpu_custom_call.1} parent=1 // pred_region
      %s101 = ssub.s32 512, 512
      %102 = vsyncadd [#allocation12], %s101
      %s104 = sshll.u32 [#allocation13], 4
      %s105 = int_to_ptr.vmem [resolvable:$true] %s104
      %107 = dma.hbm_to_vmem [thread:$0]  %s6, 512, %s105, [#allocation12]
    $region29: #{tpu_custom_call.1} parent=1 // pred_fallthru
      _
    // Predicated region
    $region30: #{tpu_custom_call.1} parent=1 // pred_check
      _
    $region31: #{tpu_custom_call.1} parent=1 // pred_check_branch
      %109 = sbr.rel (0) target = $region33
    $region32: #{tpu_custom_call.1} parent=1 // pred_region
      %s111 = ssub.s32 1024, 1024
      %112 = vsyncadd [#allocation15], %s111
      %s113 = sshll.u32 [#allocation14], 4
      %s114 = int_to_ptr.vmem [resolvable:$true] %s113
      %119 = dma.hbm_to_vmem [thread:$0]  %s7, 1024, %s114, [#allocation15], 64, 64, 4
    $region33: #{tpu_custom_call.1} parent=1 // pred_fallthru
      _
    // Predicated region
    $region34: #{tpu_custom_call.1} parent=1 // pred_check
      _
    $region35: #{tpu_custom_call.1} parent=1 // pred_check_branch
      %121 = sbr.rel (0) target = $region37
    $region36: #{tpu_custom_call.1} parent=1 // pred_region
      %s123 = ssub.s32 128, 128
      %124 = vsyncadd [#allocation15], %s123
      %s126 = sshll.u32 [#allocation16], 4
      %s127 = int_to_ptr.vmem [resolvable:$true] %s126
      %129 = dma.hbm_to_vmem [thread:$0]  %s8, 128, %s127, [#allocation15]
    $region37: #{tpu_custom_call.1} parent=1 // pred_fallthru
      _
    // Predicated region
    $region38: #{tpu_custom_call.1} parent=1 // pred_check
      _
    $region39: #{tpu_custom_call.1} parent=1 // pred_check_branch
      %131 = sbr.rel (0) target = $region41
    $region40: #{tpu_custom_call.1} parent=1 // pred_region
      _
    $region41: #{tpu_custom_call.1} parent=1 // pred_fallthru
      _
    // Predicated region
    $region42: #{tpu_custom_call.1} parent=1 // pred_check
      _
    $region43: #{tpu_custom_call.1} parent=1 // pred_check_branch
      %133 = sbr.rel (0) target = $region45
    $region44: #{tpu_custom_call.1} parent=1 // pred_region
      %s135 = ssub.s32 256, 256
      %136 = vsyncadd [#allocation18], %s135
      %s137 = sshll.u32 [#allocation17], 4
      %s138 = int_to_ptr.vmem [resolvable:$true] %s137
      %143 = dma.hbm_to_vmem [thread:$0]  %s10, 256, %s138, [#allocation18], 128, 128, 8
    $region45: #{tpu_custom_call.1} parent=1 // pred_fallthru
      _
    // Predicated region
    $region46: #{tpu_custom_call.1} parent=1 // pred_check
      _
    $region47: #{tpu_custom_call.1} parent=1 // pred_check_branch
      %145 = sbr.rel (0) target = $region49
    $region48: #{tpu_custom_call.1} parent=1 // pred_region
      %146 = dma.done [#allocation3], 1024
    $region49: #{tpu_custom_call.1} parent=1 // pred_fallthru
      _
    // Predicated region
    $region50: #{tpu_custom_call.1} parent=1 // pred_check
      _
    $region51: #{tpu_custom_call.1} parent=1 // pred_check_branch
      %148 = sbr.rel (0) target = $region53
    $region52: #{tpu_custom_call.1} parent=1 // pred_region
      %149 = dma.done [#allocation6], 4096
    $region53: #{tpu_custom_call.1} parent=1 // pred_fallthru
      _
    // Predicated region
    $region54: #{tpu_custom_call.1} parent=1 // pred_check
      _
    $region55: #{tpu_custom_call.1} parent=1 // pred_check_branch
      %151 = sbr.rel (0) target = $region57
    $region56: #{tpu_custom_call.1} parent=1 // pred_region
      %152 = dma.done [#allocation6], 4096
    $region57: #{tpu_custom_call.1} parent=1 // pred_fallthru
      _
    // Predicated region
    $region58: #{tpu_custom_call.1} parent=1 // pred_check
      _
    $region59: #{tpu_custom_call.1} parent=1 // pred_check_branch
      %154 = sbr.rel (0) target = $region61
    $region60: #{tpu_custom_call.1} parent=1 // pred_region
      %155 = dma.done [#allocation9], 512
    $region61: #{tpu_custom_call.1} parent=1 // pred_fallthru
      _
    // Predicated region
    $region62: #{tpu_custom_call.1} parent=1 // pred_check
      _
    $region63: #{tpu_custom_call.1} parent=1 // pred_check_branch
      %157 = sbr.rel (0) target = $region65
    $region64: #{tpu_custom_call.1} parent=1 // pred_region
      %158 = dma.done [#allocation9], 4096
    $region65: #{tpu_custom_call.1} parent=1 // pred_fallthru
      _
    // Predicated region
    $region66: #{tpu_custom_call.1} parent=1 // pred_check
      _
    $region67: #{tpu_custom_call.1} parent=1 // pred_check_branch
      %160 = sbr.rel (0) target = $region69
    $region68: #{tpu_custom_call.1} parent=1 // pred_region
      %161 = dma.done [#allocation12], 4096
    $region69: #{tpu_custom_call.1} parent=1 // pred_fallthru
      _
    // Predicated region
    $region70: #{tpu_custom_call.1} parent=1 // pred_check
      _
    $region71: #{tpu_custom_call.1} parent=1 // pred_check_branch
      %163 = sbr.rel (0) target = $region73
    $region72: #{tpu_custom_call.1} parent=1 // pred_region
      %164 = dma.done [#allocation12], 512
    $region73: #{tpu_custom_call.1} parent=1 // pred_fallthru
      _
    // Predicated region
    $region74: #{tpu_custom_call.1} parent=1 // pred_check
      _
    $region75: #{tpu_custom_call.1} parent=1 // pred_check_branch
      %166 = sbr.rel (0) target = $region77
    $region76: #{tpu_custom_call.1} parent=1 // pred_region
      %167 = dma.done [#allocation15], 1024
    $region77: #{tpu_custom_call.1} parent=1 // pred_fallthru
      _
    // Predicated region
    $region78: #{tpu_custom_call.1} parent=1 // pred_check
      _
    $region79: #{tpu_custom_call.1} parent=1 // pred_check_branch
      %169 = sbr.rel (0) target = $region81
    $region80: #{tpu_custom_call.1} parent=1 // pred_region
      %170 = dma.done [#allocation15], 128
    $region81: #{tpu_custom_call.1} parent=1 // pred_fallthru
      _
    // Predicated region
    $region82: #{tpu_custom_call.1} parent=1 // pred_check
      _
    $region83: #{tpu_custom_call.1} parent=1 // pred_check_branch
      %172 = sbr.rel (0) target = $region85
    $region84: #{tpu_custom_call.1} parent=1 // pred_region
      %173 = dma.done [#allocation18], 256
    $region85: #{tpu_custom_call.1} parent=1 // pred_fallthru
      _
    %v175 = vlaneseq
    %v176 = vand.u32 %v175, 127
    %v177 = vld [vmem:[%s9] sm:$0xff]
    %s178 = scalar_lea.vmem %s9, 8
    %v179 = vld [vmem:[%s178] sm:$0xff]
    %v180 = vld [vmem:[#allocation17] sm:$0xff]
    %s181 = scalar_lea.vmem [#allocation17], 8
    %v182 = vld [vmem:[%s181] sm:$0xff]
    loop: start=1, step=1, limit=8
    $region86: #{tpu_custom_call.1} parent=1 // loop_pre_header
      _
    $region87: #{tpu_custom_call.1} parent=1 // loop_header
      %s184 = sphi 1, %s188
      %p185 = scmp.ge.s32.totalorder %s184, 8
      %v189 = vphi %v177, %v882
      %v190 = vphi %v179, %v1464
      %v191 = vphi %v180, %v880
      %v192 = vphi %v182, %v1462
      %v193 = vphi 1, %v1576
    $region88: #{tpu_custom_call.1} parent=1 // loop_header_branch
      %187 = sbr.rel (%p185) target = $region92
    $region89: #{tpu_custom_call.1} parent=1 // loop_body
      %vm194 = vcmp.eq.s32.totalorder %v176, %v193
      %v195 = vsel %vm194, 1.0, 0.0
      %v196 = vpack.c.bf16 %v195, %v195
      %v197 = vld [vmem:[#allocation2] sm:$0xf]
      %v198 = vld [vmem:[#allocation2 + $0x4] sm:$0xf]
      %v199 = vld [vmem:[#allocation2 + $0x8] sm:$0xf]
      %v200 = vld [vmem:[#allocation2 + $0xc] sm:$0xf]
      %v201 = vld [vmem:[#allocation2 + $0x10] sm:$0xf]
      %v202 = vld [vmem:[#allocation2 + $0x14] sm:$0xf]
      %v203 = vld [vmem:[#allocation2 + $0x18] sm:$0xf]
      %v204 = vld [vmem:[#allocation2 + $0x1c] sm:$0xf]
      %v205 = vld [vmem:[#allocation2 + $0x20] sm:$0xf]
      %v206 = vld [vmem:[#allocation2 + $0x24] sm:$0xf]
      %v207 = vld [vmem:[#allocation2 + $0x28] sm:$0xf]
      %v208 = vld [vmem:[#allocation2 + $0x2c] sm:$0xf]
      %v209 = vld [vmem:[#allocation2 + $0x30] sm:$0xf]
      %v210 = vld [vmem:[#allocation2 + $0x34] sm:$0xf]
      %v211 = vld [vmem:[#allocation2 + $0x38] sm:$0xf]
      %v212 = vld [vmem:[#allocation2 + $0x3c] sm:$0xf]
      %v229 = vunpack.c.l.b16 %v197
      %v230 = vunpack.c.l.b16 %v198
      %v231 = vunpack.c.l.b16 %v199
      %v232 = vunpack.c.l.b16 %v200
      %v233 = vunpack.c.l.b16 %v201
      %v234 = vunpack.c.l.b16 %v202
      %v235 = vunpack.c.l.b16 %v203
      %v236 = vunpack.c.l.b16 %v204
      %v237 = vunpack.c.l.b16 %v205
      %v238 = vunpack.c.l.b16 %v206
      %v239 = vunpack.c.l.b16 %v207
      %v240 = vunpack.c.l.b16 %v208
      %v241 = vunpack.c.l.b16 %v209
      %v242 = vunpack.c.l.b16 %v210
      %v243 = vunpack.c.l.b16 %v211
      %v244 = vunpack.c.l.b16 %v212
      %v245 = vpack.c.b16 %v230, %v229
      %v246 = vpack.c.b16 %v232, %v231
      %v247 = vpack.c.b16 %v234, %v233
      %v248 = vpack.c.b16 %v236, %v235
      %v249 = vpack.c.b16 %v238, %v237
      %v250 = vpack.c.b16 %v240, %v239
      %v251 = vpack.c.b16 %v242, %v241
      %v252 = vpack.c.b16 %v244, %v243
      %261 = vmatprep.subr.bf16.mxu0 0
      %262 = vmatpush1.bf16.msra.mxu0 %v252
      %263 = vmatprep.subr.bf16.mxu0 0
      %264 = vmatpush1.bf16.msra.mxu0 %v251
      %265 = vmatprep.subr.bf16.mxu0 0
      %266 = vmatpush1.bf16.msra.mxu0 %v250
      %267 = vmatprep.subr.bf16.mxu0 0
      %268 = vmatpush1.bf16.msra.mxu0 %v249
      %269 = vmatprep.subr.bf16.mxu0 0
      %270 = vmatpush1.bf16.msra.mxu0 %v248
      %271 = vmatprep.subr.bf16.mxu0 0
      %272 = vmatpush1.bf16.msra.mxu0 %v247
      %273 = vmatprep.subr.bf16.mxu0 0
      %274 = vmatpush1.bf16.msra.mxu0 %v246
      %275 = vmatprep.subr.bf16.mxu0 0
      %276 = vmatpush1.bf16.msra.mxu0 %v245
      %277 = vmatprep.subr.bf16.mxu0 0
      %278 = vmatpush2.bf16.msra.mxu0 0
      %279 = vmatprep.subr.bf16.mxu0 0
      %280 = vmatpush2.bf16.msra.mxu0 0
      %281 = vmatprep.subr.bf16.mxu0 0
      %282 = vmatpush2.bf16.msra.mxu0 0
      %283 = vmatprep.subr.bf16.mxu0 0
      %284 = vmatpush2.bf16.msra.mxu0 0
      %285 = vmatprep.subr.bf16.mxu0 0
      %286 = vmatpush2.bf16.msra.mxu0 0
      %287 = vmatprep.subr.bf16.mxu0 0
      %288 = vmatpush2.bf16.msra.mxu0 0
      %289 = vmatprep.subr.bf16.mxu0 0
      %290 = vmatpush2.bf16.msra.mxu0 0
      %291 = vmatprep.subr.bf16.mxu0 0
      %292 = vmatpush2.bf16.msra.mxu0 0
      %293 = vmatprep.mubr.bf16.mxu0 0
      %294 = vmatmul.mubr.bf16.gmra.mxu0 %v196
      %v295 = vpop.f32.mrf.mxu0
      %v296 = vadd.f32 0.0, %v295
      %v297 = vpop.f32.mrf.mxu0
      %v298 = vpop.f32.mrf.mxu0
      %v299 = vpop.f32.mrf.mxu0
      %300 = vdwg.mxu0
      %v301 = vld [vmem:[#allocation5] sm:$0xff]
      %v302 = vld [vmem:[#allocation5 + $0x8] sm:$0xff]
      %v303 = vld [vmem:[#allocation5 + $0x10] sm:$0xff]
      %v304 = vld [vmem:[#allocation5 + $0x18] sm:$0xff]
      %v305 = vld [vmem:[#allocation5 + $0x20] sm:$0xff]
      %v306 = vld [vmem:[#allocation5 + $0x28] sm:$0xff]
      %v307 = vld [vmem:[#allocation5 + $0x30] sm:$0xff]
      %v308 = vld [vmem:[#allocation5 + $0x38] sm:$0xff]
      %v309 = vld [vmem:[#allocation5 + $0x40] sm:$0xff]
      %v310 = vld [vmem:[#allocation5 + $0x48] sm:$0xff]
      %v311 = vld [vmem:[#allocation5 + $0x50] sm:$0xff]
      %v312 = vld [vmem:[#allocation5 + $0x58] sm:$0xff]
      %v313 = vld [vmem:[#allocation5 + $0x60] sm:$0xff]
      %v314 = vld [vmem:[#allocation5 + $0x68] sm:$0xff]
      %v315 = vld [vmem:[#allocation5 + $0x70] sm:$0xff]
      %v316 = vld [vmem:[#allocation5 + $0x78] sm:$0xff]
      %v317 = vld [vmem:[#allocation5 + $0x80] sm:$0xff]
      %v318 = vld [vmem:[#allocation5 + $0x88] sm:$0xff]
      %v319 = vld [vmem:[#allocation5 + $0x90] sm:$0xff]
      %v320 = vld [vmem:[#allocation5 + $0x98] sm:$0xff]
      %v321 = vld [vmem:[#allocation5 + $0xa0] sm:$0xff]
      %v322 = vld [vmem:[#allocation5 + $0xa8] sm:$0xff]
      %v323 = vld [vmem:[#allocation5 + $0xb0] sm:$0xff]
      %v324 = vld [vmem:[#allocation5 + $0xb8] sm:$0xff]
      %v325 = vld [vmem:[#allocation5 + $0xc0] sm:$0xff]
      %v326 = vld [vmem:[#allocation5 + $0xc8] sm:$0xff]
      %v327 = vld [vmem:[#allocation5 + $0xd0] sm:$0xff]
      %v328 = vld [vmem:[#allocation5 + $0xd8] sm:$0xff]
      %v329 = vld [vmem:[#allocation5 + $0xe0] sm:$0xff]
      %v330 = vld [vmem:[#allocation5 + $0xe8] sm:$0xff]
      %v331 = vld [vmem:[#allocation5 + $0xf0] sm:$0xff]
      %v332 = vld [vmem:[#allocation5 + $0xf8] sm:$0xff]
      %v333 = vld [vmem:[#allocation7] sm:$0xff]
      %v334 = vld [vmem:[#allocation7 + $0x8] sm:$0xff]
      %v335 = vld [vmem:[#allocation7 + $0x10] sm:$0xff]
      %v336 = vld [vmem:[#allocation7 + $0x18] sm:$0xff]
      %v337 = vld [vmem:[#allocation7 + $0x20] sm:$0xff]
      %v338 = vld [vmem:[#allocation7 + $0x28] sm:$0xff]
      %v339 = vld [vmem:[#allocation7 + $0x30] sm:$0xff]
      %v340 = vld [vmem:[#allocation7 + $0x38] sm:$0xff]
      %v341 = vld [vmem:[#allocation7 + $0x40] sm:$0xff]
      %v342 = vld [vmem:[#allocation7 + $0x48] sm:$0xff]
      %v343 = vld [vmem:[#allocation7 + $0x50] sm:$0xff]
      %v344 = vld [vmem:[#allocation7 + $0x58] sm:$0xff]
      %v345 = vld [vmem:[#allocation7 + $0x60] sm:$0xff]
      %v346 = vld [vmem:[#allocation7 + $0x68] sm:$0xff]
      %v347 = vld [vmem:[#allocation7 + $0x70] sm:$0xff]
      %v348 = vld [vmem:[#allocation7 + $0x78] sm:$0xff]
      %v349 = vld [vmem:[#allocation7 + $0x80] sm:$0xff]
      %v350 = vld [vmem:[#allocation7 + $0x88] sm:$0xff]
      %v351 = vld [vmem:[#allocation7 + $0x90] sm:$0xff]
      %v352 = vld [vmem:[#allocation7 + $0x98] sm:$0xff]
      %v353 = vld [vmem:[#allocation7 + $0xa0] sm:$0xff]
      %v354 = vld [vmem:[#allocation7 + $0xa8] sm:$0xff]
      %v355 = vld [vmem:[#allocation7 + $0xb0] sm:$0xff]
      %v356 = vld [vmem:[#allocation7 + $0xb8] sm:$0xff]
      %v357 = vld [vmem:[#allocation7 + $0xc0] sm:$0xff]
      %v358 = vld [vmem:[#allocation7 + $0xc8] sm:$0xff]
      %v359 = vld [vmem:[#allocation7 + $0xd0] sm:$0xff]
      %v360 = vld [vmem:[#allocation7 + $0xd8] sm:$0xff]
      %v361 = vld [vmem:[#allocation7 + $0xe0] sm:$0xff]
      %v362 = vld [vmem:[#allocation7 + $0xe8] sm:$0xff]
      %v363 = vld [vmem:[#allocation7 + $0xf0] sm:$0xff]
      %v364 = vld [vmem:[#allocation7 + $0xf8] sm:$0xff]
      %v365 = vld [vmem:[#allocation8] sm:$0xff]
      %v366 = vld [vmem:[#allocation8 + $0x8] sm:$0xff]
      %v367 = vld [vmem:[#allocation8 + $0x10] sm:$0xff]
      %v368 = vld [vmem:[#allocation8 + $0x18] sm:$0xff]
      %v369 = vpack.c.bf16 %v296, %v296
      %v370 = vpack.c.bf16 %v189, %v189
      %v403 = vunpack.c.l.b16 %v333
      %v404 = vunpack.c.h.b16 %v333
      %v405 = vunpack.c.l.b16 %v334
      %v406 = vunpack.c.h.b16 %v334
      %v407 = vunpack.c.l.b16 %v335
      %v408 = vunpack.c.h.b16 %v335
      %v409 = vunpack.c.l.b16 %v336
      %v410 = vunpack.c.h.b16 %v336
      %v411 = vunpack.c.l.b16 %v337
      %v412 = vunpack.c.h.b16 %v337
      %v413 = vunpack.c.l.b16 %v338
      %v414 = vunpack.c.h.b16 %v338
      %v415 = vunpack.c.l.b16 %v339
      %v416 = vunpack.c.h.b16 %v339
      %v417 = vunpack.c.l.b16 %v340
      %v418 = vunpack.c.h.b16 %v340
      %v419 = vunpack.c.l.b16 %v341
      %v420 = vunpack.c.h.b16 %v341
      %v421 = vunpack.c.l.b16 %v342
      %v422 = vunpack.c.h.b16 %v342
      %v423 = vunpack.c.l.b16 %v343
      %v424 = vunpack.c.h.b16 %v343
      %v425 = vunpack.c.l.b16 %v344
      %v426 = vunpack.c.h.b16 %v344
      %v427 = vunpack.c.l.b16 %v345
      %v428 = vunpack.c.h.b16 %v345
      %v429 = vunpack.c.l.b16 %v346
      %v430 = vunpack.c.h.b16 %v346
      %v431 = vunpack.c.l.b16 %v347
      %v432 = vunpack.c.h.b16 %v347
      %v433 = vunpack.c.l.b16 %v348
      %v434 = vunpack.c.h.b16 %v348
      %v435 = vunpack.c.l.b16 %v349
      %v436 = vunpack.c.h.b16 %v349
      %v437 = vunpack.c.l.b16 %v350
      %v438 = vunpack.c.h.b16 %v350
      %v439 = vunpack.c.l.b16 %v351
      %v440 = vunpack.c.h.b16 %v351
      %v441 = vunpack.c.l.b16 %v352
      %v442 = vunpack.c.h.b16 %v352
      %v443 = vunpack.c.l.b16 %v353
      %v444 = vunpack.c.h.b16 %v353
      %v445 = vunpack.c.l.b16 %v354
      %v446 = vunpack.c.h.b16 %v354
      %v447 = vunpack.c.l.b16 %v355
      %v448 = vunpack.c.h.b16 %v355
      %v449 = vunpack.c.l.b16 %v356
      %v450 = vunpack.c.h.b16 %v356
      %v451 = vunpack.c.l.b16 %v357
      %v452 = vunpack.c.h.b16 %v357
      %v453 = vunpack.c.l.b16 %v358
      %v454 = vunpack.c.h.b16 %v358
      %v455 = vunpack.c.l.b16 %v359
      %v456 = vunpack.c.h.b16 %v359
      %v457 = vunpack.c.l.b16 %v360
      %v458 = vunpack.c.h.b16 %v360
      %v459 = vunpack.c.l.b16 %v361
      %v460 = vunpack.c.h.b16 %v361
      %v461 = vunpack.c.l.b16 %v362
      %v462 = vunpack.c.h.b16 %v362
      %v463 = vunpack.c.l.b16 %v363
      %v464 = vunpack.c.h.b16 %v363
      %v465 = vunpack.c.l.b16 %v364
      %v466 = vunpack.c.h.b16 %v364
      %v467 = vpack.c.b16 %v407, %v403
      %v468 = vpack.c.b16 %v408, %v404
      %v469 = vpack.c.b16 %v409, %v405
      %v470 = vpack.c.b16 %v410, %v406
      %v471 = vpack.c.b16 %v415, %v411
      %v472 = vpack.c.b16 %v416, %v412
      %v473 = vpack.c.b16 %v417, %v413
      %v474 = vpack.c.b16 %v418, %v414
      %v475 = vpack.c.b16 %v423, %v419
      %v476 = vpack.c.b16 %v424, %v420
      %v477 = vpack.c.b16 %v425, %v421
      %v478 = vpack.c.b16 %v426, %v422
      %v479 = vpack.c.b16 %v431, %v427
      %v480 = vpack.c.b16 %v432, %v428
      %v481 = vpack.c.b16 %v433, %v429
      %v482 = vpack.c.b16 %v434, %v430
      %v483 = vpack.c.b16 %v439, %v435
      %v484 = vpack.c.b16 %v440, %v436
      %v485 = vpack.c.b16 %v441, %v437
      %v486 = vpack.c.b16 %v442, %v438
      %v487 = vpack.c.b16 %v447, %v443
      %v488 = vpack.c.b16 %v448, %v444
      %v489 = vpack.c.b16 %v449, %v445
      %v490 = vpack.c.b16 %v450, %v446
      %v491 = vpack.c.b16 %v455, %v451
      %v492 = vpack.c.b16 %v456, %v452
      %v493 = vpack.c.b16 %v457, %v453
      %v494 = vpack.c.b16 %v458, %v454
      %v495 = vpack.c.b16 %v463, %v459
      %v496 = vpack.c.b16 %v464, %v460
      %v497 = vpack.c.b16 %v465, %v461
      %v498 = vpack.c.b16 %v466, %v462
      %531 = vmatprep.subr.bf16.mxu0 %v496
      %532 = vmatpush1.bf16.msra.mxu0 %v495
      %533 = vmatprep.subr.bf16.mxu0 %v492
      %534 = vmatpush1.bf16.msra.mxu0 %v491
      %535 = vmatprep.subr.bf16.mxu0 %v488
      %536 = vmatpush1.bf16.msra.mxu0 %v487
      %537 = vmatprep.subr.bf16.mxu0 %v484
      %538 = vmatpush1.bf16.msra.mxu0 %v483
      %539 = vmatprep.subr.bf16.mxu0 %v480
      %540 = vmatpush1.bf16.msra.mxu0 %v479
      %541 = vmatprep.subr.bf16.mxu0 %v476
      %542 = vmatpush1.bf16.msra.mxu0 %v475
      %543 = vmatprep.subr.bf16.mxu0 %v472
      %544 = vmatpush1.bf16.msra.mxu0 %v471
      %545 = vmatprep.subr.bf16.mxu0 %v468
      %546 = vmatpush1.bf16.msra.mxu0 %v467
      %547 = vmatprep.subr.bf16.mxu0 0
      %548 = vmatpush2.bf16.msra.mxu0 0
      %549 = vmatprep.subr.bf16.mxu0 0
      %550 = vmatpush2.bf16.msra.mxu0 0
      %551 = vmatprep.subr.bf16.mxu0 0
      %552 = vmatpush2.bf16.msra.mxu0 0
      %553 = vmatprep.subr.bf16.mxu0 0
      %554 = vmatpush2.bf16.msra.mxu0 0
      %555 = vmatprep.subr.bf16.mxu0 0
      %556 = vmatpush2.bf16.msra.mxu0 0
      %557 = vmatprep.subr.bf16.mxu0 0
      %558 = vmatpush2.bf16.msra.mxu0 0
      %559 = vmatprep.subr.bf16.mxu0 0
      %560 = vmatpush2.bf16.msra.mxu0 0
      %561 = vmatprep.subr.bf16.mxu0 0
      %562 = vmatpush2.bf16.msra.mxu0 0
      %563 = vmatprep.mubr.bf16.mxu0 0
      %564 = vmatmul.mubr.bf16.gmra.mxu0 %v370
      %v565 = vpop.f32.mrf.mxu0
      %v566 = vadd.f32 0.0, %v565
      %v567 = vpop.f32.mrf.mxu0
      %v568 = vadd.f32 0.0, %v567
      %v569 = vpop.f32.mrf.mxu0
      %v570 = vpop.f32.mrf.mxu0
      %571 = vdwg.mxu0
      %572 = vmatprep.subr.bf16.mxu0 %v498
      %573 = vmatpush1.bf16.msra.mxu0 %v497
      %574 = vmatprep.subr.bf16.mxu0 %v494
      %575 = vmatpush1.bf16.msra.mxu0 %v493
      %576 = vmatprep.subr.bf16.mxu0 %v490
      %577 = vmatpush1.bf16.msra.mxu0 %v489
      %578 = vmatprep.subr.bf16.mxu0 %v486
      %579 = vmatpush1.bf16.msra.mxu0 %v485
      %580 = vmatprep.subr.bf16.mxu0 %v482
      %581 = vmatpush1.bf16.msra.mxu0 %v481
      %582 = vmatprep.subr.bf16.mxu0 %v478
      %583 = vmatpush1.bf16.msra.mxu0 %v477
      %584 = vmatprep.subr.bf16.mxu0 %v474
      %585 = vmatpush1.bf16.msra.mxu0 %v473
      %586 = vmatprep.subr.bf16.mxu0 %v470
      %587 = vmatpush1.bf16.msra.mxu0 %v469
      %588 = vmatprep.subr.bf16.mxu0 0
      %589 = vmatpush2.bf16.msra.mxu0 0
      %590 = vmatprep.subr.bf16.mxu0 0
      %591 = vmatpush2.bf16.msra.mxu0 0
      %592 = vmatprep.subr.bf16.mxu0 0
      %593 = vmatpush2.bf16.msra.mxu0 0
      %594 = vmatprep.subr.bf16.mxu0 0
      %595 = vmatpush2.bf16.msra.mxu0 0
      %596 = vmatprep.subr.bf16.mxu0 0
      %597 = vmatpush2.bf16.msra.mxu0 0
      %598 = vmatprep.subr.bf16.mxu0 0
      %599 = vmatpush2.bf16.msra.mxu0 0
      %600 = vmatprep.subr.bf16.mxu0 0
      %601 = vmatpush2.bf16.msra.mxu0 0
      %602 = vmatprep.subr.bf16.mxu0 0
      %603 = vmatpush2.bf16.msra.mxu0 0
      %604 = vmatprep.mubr.bf16.mxu0 0
      %605 = vmatmul.mubr.bf16.gmra.mxu0 %v370
      %v606 = vpop.f32.mrf.mxu0
      %v607 = vadd.f32 0.0, %v606
      %v608 = vpop.f32.mrf.mxu0
      %v609 = vadd.f32 0.0, %v608
      %v610 = vpop.f32.mrf.mxu0
      %v611 = vpop.f32.mrf.mxu0
      %612 = vdwg.mxu0
      %v645 = vunpack.c.l.b16 %v301
      %v646 = vunpack.c.h.b16 %v301
      %v647 = vunpack.c.l.b16 %v302
      %v648 = vunpack.c.h.b16 %v302
      %v649 = vunpack.c.l.b16 %v303
      %v650 = vunpack.c.h.b16 %v303
      %v651 = vunpack.c.l.b16 %v304
      %v652 = vunpack.c.h.b16 %v304
      %v653 = vunpack.c.l.b16 %v305
      %v654 = vunpack.c.h.b16 %v305
      %v655 = vunpack.c.l.b16 %v306
      %v656 = vunpack.c.h.b16 %v306
      %v657 = vunpack.c.l.b16 %v307
      %v658 = vunpack.c.h.b16 %v307
      %v659 = vunpack.c.l.b16 %v308
      %v660 = vunpack.c.h.b16 %v308
      %v661 = vunpack.c.l.b16 %v309
      %v662 = vunpack.c.h.b16 %v309
      %v663 = vunpack.c.l.b16 %v310
      %v664 = vunpack.c.h.b16 %v310
      %v665 = vunpack.c.l.b16 %v311
      %v666 = vunpack.c.h.b16 %v311
      %v667 = vunpack.c.l.b16 %v312
      %v668 = vunpack.c.h.b16 %v312
      %v669 = vunpack.c.l.b16 %v313
      %v670 = vunpack.c.h.b16 %v313
      %v671 = vunpack.c.l.b16 %v314
      %v672 = vunpack.c.h.b16 %v314
      %v673 = vunpack.c.l.b16 %v315
      %v674 = vunpack.c.h.b16 %v315
      %v675 = vunpack.c.l.b16 %v316
      %v676 = vunpack.c.h.b16 %v316
      %v677 = vunpack.c.l.b16 %v317
      %v678 = vunpack.c.h.b16 %v317
      %v679 = vunpack.c.l.b16 %v318
      %v680 = vunpack.c.h.b16 %v318
      %v681 = vunpack.c.l.b16 %v319
      %v682 = vunpack.c.h.b16 %v319
      %v683 = vunpack.c.l.b16 %v320
      %v684 = vunpack.c.h.b16 %v320
      %v685 = vunpack.c.l.b16 %v321
      %v686 = vunpack.c.h.b16 %v321
      %v687 = vunpack.c.l.b16 %v322
      %v688 = vunpack.c.h.b16 %v322
      %v689 = vunpack.c.l.b16 %v323
      %v690 = vunpack.c.h.b16 %v323
      %v691 = vunpack.c.l.b16 %v324
      %v692 = vunpack.c.h.b16 %v324
      %v693 = vunpack.c.l.b16 %v325
      %v694 = vunpack.c.h.b16 %v325
      %v695 = vunpack.c.l.b16 %v326
      %v696 = vunpack.c.h.b16 %v326
      %v697 = vunpack.c.l.b16 %v327
      %v698 = vunpack.c.h.b16 %v327
      %v699 = vunpack.c.l.b16 %v328
      %v700 = vunpack.c.h.b16 %v328
      %v701 = vunpack.c.l.b16 %v329
      %v702 = vunpack.c.h.b16 %v329
      %v703 = vunpack.c.l.b16 %v330
      %v704 = vunpack.c.h.b16 %v330
      %v705 = vunpack.c.l.b16 %v331
      %v706 = vunpack.c.h.b16 %v331
      %v707 = vunpack.c.l.b16 %v332
      %v708 = vunpack.c.h.b16 %v332
      %v709 = vpack.c.b16 %v649, %v645
      %v710 = vpack.c.b16 %v650, %v646
      %v711 = vpack.c.b16 %v651, %v647
      %v712 = vpack.c.b16 %v652, %v648
      %v713 = vpack.c.b16 %v657, %v653
      %v714 = vpack.c.b16 %v658, %v654
      %v715 = vpack.c.b16 %v659, %v655
      %v716 = vpack.c.b16 %v660, %v656
      %v717 = vpack.c.b16 %v665, %v661
      %v718 = vpack.c.b16 %v666, %v662
      %v719 = vpack.c.b16 %v667, %v663
      %v720 = vpack.c.b16 %v668, %v664
      %v721 = vpack.c.b16 %v673, %v669
      %v722 = vpack.c.b16 %v674, %v670
      %v723 = vpack.c.b16 %v675, %v671
      %v724 = vpack.c.b16 %v676, %v672
      %v725 = vpack.c.b16 %v681, %v677
      %v726 = vpack.c.b16 %v682, %v678
      %v727 = vpack.c.b16 %v683, %v679
      %v728 = vpack.c.b16 %v684, %v680
      %v729 = vpack.c.b16 %v689, %v685
      %v730 = vpack.c.b16 %v690, %v686
      %v731 = vpack.c.b16 %v691, %v687
      %v732 = vpack.c.b16 %v692, %v688
      %v733 = vpack.c.b16 %v697, %v693
      %v734 = vpack.c.b16 %v698, %v694
      %v735 = vpack.c.b16 %v699, %v695
      %v736 = vpack.c.b16 %v700, %v696
      %v737 = vpack.c.b16 %v705, %v701
      %v738 = vpack.c.b16 %v706, %v702
      %v739 = vpack.c.b16 %v707, %v703
      %v740 = vpack.c.b16 %v708, %v704
      %773 = vmatprep.subr.bf16.mxu0 %v738
      %774 = vmatpush1.bf16.msra.mxu0 %v737
      %775 = vmatprep.subr.bf16.mxu0 %v734
      %776 = vmatpush1.bf16.msra.mxu0 %v733
      %777 = vmatprep.subr.bf16.mxu0 %v730
      %778 = vmatpush1.bf16.msra.mxu0 %v729
      %779 = vmatprep.subr.bf16.mxu0 %v726
      %780 = vmatpush1.bf16.msra.mxu0 %v725
      %781 = vmatprep.subr.bf16.mxu0 %v722
      %782 = vmatpush1.bf16.msra.mxu0 %v721
      %783 = vmatprep.subr.bf16.mxu0 %v718
      %784 = vmatpush1.bf16.msra.mxu0 %v717
      %785 = vmatprep.subr.bf16.mxu0 %v714
      %786 = vmatpush1.bf16.msra.mxu0 %v713
      %787 = vmatprep.subr.bf16.mxu0 %v710
      %788 = vmatpush1.bf16.msra.mxu0 %v709
      %789 = vmatprep.subr.bf16.mxu0 0
      %790 = vmatpush2.bf16.msra.mxu0 0
      %791 = vmatprep.subr.bf16.mxu0 0
      %792 = vmatpush2.bf16.msra.mxu0 0
      %793 = vmatprep.subr.bf16.mxu0 0
      %794 = vmatpush2.bf16.msra.mxu0 0
      %795 = vmatprep.subr.bf16.mxu0 0
      %796 = vmatpush2.bf16.msra.mxu0 0
      %797 = vmatprep.subr.bf16.mxu0 0
      %798 = vmatpush2.bf16.msra.mxu0 0
      %799 = vmatprep.subr.bf16.mxu0 0
      %800 = vmatpush2.bf16.msra.mxu0 0
      %801 = vmatprep.subr.bf16.mxu0 0
      %802 = vmatpush2.bf16.msra.mxu0 0
      %803 = vmatprep.subr.bf16.mxu0 0
      %804 = vmatpush2.bf16.msra.mxu0 0
      %805 = vmatprep.mubr.bf16.mxu0 0
      %806 = vmatmul.mubr.bf16.gmra.mxu0 %v369
      %v807 = vpop.f32.mrf.mxu0
      %v808 = vadd.f32 %v566, %v807
      %v809 = vpop.f32.mrf.mxu0
      %v810 = vadd.f32 %v568, %v809
      %v811 = vpop.f32.mrf.mxu0
      %v812 = vpop.f32.mrf.mxu0
      %813 = vdwg.mxu0
      %814 = vmatprep.subr.bf16.mxu0 %v740
      %815 = vmatpush1.bf16.msra.mxu0 %v739
      %816 = vmatprep.subr.bf16.mxu0 %v736
      %817 = vmatpush1.bf16.msra.mxu0 %v735
      %818 = vmatprep.subr.bf16.mxu0 %v732
      %819 = vmatpush1.bf16.msra.mxu0 %v731
      %820 = vmatprep.subr.bf16.mxu0 %v728
      %821 = vmatpush1.bf16.msra.mxu0 %v727
      %822 = vmatprep.subr.bf16.mxu0 %v724
      %823 = vmatpush1.bf16.msra.mxu0 %v723
      %824 = vmatprep.subr.bf16.mxu0 %v720
      %825 = vmatpush1.bf16.msra.mxu0 %v719
      %826 = vmatprep.subr.bf16.mxu0 %v716
      %827 = vmatpush1.bf16.msra.mxu0 %v715
      %828 = vmatprep.subr.bf16.mxu0 %v712
      %829 = vmatpush1.bf16.msra.mxu0 %v711
      %830 = vmatprep.subr.bf16.mxu0 0
      %831 = vmatpush2.bf16.msra.mxu0 0
      %832 = vmatprep.subr.bf16.mxu0 0
      %833 = vmatpush2.bf16.msra.mxu0 0
      %834 = vmatprep.subr.bf16.mxu0 0
      %835 = vmatpush2.bf16.msra.mxu0 0
      %836 = vmatprep.subr.bf16.mxu0 0
      %837 = vmatpush2.bf16.msra.mxu0 0
      %838 = vmatprep.subr.bf16.mxu0 0
      %839 = vmatpush2.bf16.msra.mxu0 0
      %840 = vmatprep.subr.bf16.mxu0 0
      %841 = vmatpush2.bf16.msra.mxu0 0
      %842 = vmatprep.subr.bf16.mxu0 0
      %843 = vmatpush2.bf16.msra.mxu0 0
      %844 = vmatprep.subr.bf16.mxu0 0
      %845 = vmatpush2.bf16.msra.mxu0 0
      %846 = vmatprep.mubr.bf16.mxu0 0
      %847 = vmatmul.mubr.bf16.gmra.mxu0 %v369
      %v848 = vpop.f32.mrf.mxu0
      %v849 = vadd.f32 %v607, %v848
      %v850 = vpop.f32.mrf.mxu0
      %v851 = vadd.f32 %v609, %v850
      %v852 = vpop.f32.mrf.mxu0
      %v853 = vpop.f32.mrf.mxu0
      %854 = vdwg.mxu0
      %v855 = vadd.f32 %v808, %v365
      %v856 = vadd.f32 %v810, %v366
      %v857 = vadd.f32 %v849, %v367
      %v858 = vadd.f32 %v851, %v368
      %v859 = vxor.u32 %v855, 2147483648
      %v860 = vmul.f32 %v859, 1.442695
      %v861 = vpow.pop %v860
      %v862 = vadd.f32 %v861, 1.0
      %v863 = vrcp.pop %v862
      %v864 = vmul.f32 1.0, %v863
      %v865 = vxor.u32 %v856, 2147483648
      %v866 = vmul.f32 %v865, 1.442695
      %v867 = vpow.pop %v866
      %v868 = vadd.f32 %v867, 1.0
      %v869 = vrcp.pop %v868
      %v870 = vmul.f32 1.0, %v869
      %v871 = vtanh.pop %v857
      %v872 = vxor.u32 %v858, 2147483648
      %v873 = vmul.f32 %v872, 1.442695
      %v874 = vpow.pop %v873
      %v875 = vadd.f32 %v874, 1.0
      %v876 = vrcp.pop %v875
      %v877 = vmul.f32 1.0, %v876
      %v878 = vmul.f32 %v870, %v191
      %v879 = vmul.f32 %v864, %v871
      %v880 = vadd.f32 %v878, %v879
      %v881 = vtanh.pop %v880
      %v882 = vmul.f32 %v877, %v881
      %v883 = vld [vmem:[#allocation10] sm:$0xff]
      %v884 = vld [vmem:[#allocation10 + $0x8] sm:$0xff]
      %v885 = vld [vmem:[#allocation10 + $0x10] sm:$0xff]
      %v886 = vld [vmem:[#allocation10 + $0x18] sm:$0xff]
      %v887 = vld [vmem:[#allocation10 + $0x20] sm:$0xff]
      %v888 = vld [vmem:[#allocation10 + $0x28] sm:$0xff]
      %v889 = vld [vmem:[#allocation10 + $0x30] sm:$0xff]
      %v890 = vld [vmem:[#allocation10 + $0x38] sm:$0xff]
      %v891 = vld [vmem:[#allocation10 + $0x40] sm:$0xff]
      %v892 = vld [vmem:[#allocation10 + $0x48] sm:$0xff]
      %v893 = vld [vmem:[#allocation10 + $0x50] sm:$0xff]
      %v894 = vld [vmem:[#allocation10 + $0x58] sm:$0xff]
      %v895 = vld [vmem:[#allocation10 + $0x60] sm:$0xff]
      %v896 = vld [vmem:[#allocation10 + $0x68] sm:$0xff]
      %v897 = vld [vmem:[#allocation10 + $0x70] sm:$0xff]
      %v898 = vld [vmem:[#allocation10 + $0x78] sm:$0xff]
      %v899 = vld [vmem:[#allocation10 + $0x80] sm:$0xff]
      %v900 = vld [vmem:[#allocation10 + $0x88] sm:$0xff]
      %v901 = vld [vmem:[#allocation10 + $0x90] sm:$0xff]
      %v902 = vld [vmem:[#allocation10 + $0x98] sm:$0xff]
      %v903 = vld [vmem:[#allocation10 + $0xa0] sm:$0xff]
      %v904 = vld [vmem:[#allocation10 + $0xa8] sm:$0xff]
      %v905 = vld [vmem:[#allocation10 + $0xb0] sm:$0xff]
      %v906 = vld [vmem:[#allocation10 + $0xb8] sm:$0xff]
      %v907 = vld [vmem:[#allocation10 + $0xc0] sm:$0xff]
      %v908 = vld [vmem:[#allocation10 + $0xc8] sm:$0xff]
      %v909 = vld [vmem:[#allocation10 + $0xd0] sm:$0xff]
      %v910 = vld [vmem:[#allocation10 + $0xd8] sm:$0xff]
      %v911 = vld [vmem:[#allocation10 + $0xe0] sm:$0xff]
      %v912 = vld [vmem:[#allocation10 + $0xe8] sm:$0xff]
      %v913 = vld [vmem:[#allocation10 + $0xf0] sm:$0xff]
      %v914 = vld [vmem:[#allocation10 + $0xf8] sm:$0xff]
      %v915 = vld [vmem:[#allocation11] sm:$0xff]
      %v916 = vld [vmem:[#allocation11 + $0x8] sm:$0xff]
      %v917 = vld [vmem:[#allocation11 + $0x10] sm:$0xff]
      %v918 = vld [vmem:[#allocation11 + $0x18] sm:$0xff]
      %v919 = vld [vmem:[#allocation11 + $0x20] sm:$0xff]
      %v920 = vld [vmem:[#allocation11 + $0x28] sm:$0xff]
      %v921 = vld [vmem:[#allocation11 + $0x30] sm:$0xff]
      %v922 = vld [vmem:[#allocation11 + $0x38] sm:$0xff]
      %v923 = vld [vmem:[#allocation11 + $0x40] sm:$0xff]
      %v924 = vld [vmem:[#allocation11 + $0x48] sm:$0xff]
      %v925 = vld [vmem:[#allocation11 + $0x50] sm:$0xff]
      %v926 = vld [vmem:[#allocation11 + $0x58] sm:$0xff]
      %v927 = vld [vmem:[#allocation11 + $0x60] sm:$0xff]
      %v928 = vld [vmem:[#allocation11 + $0x68] sm:$0xff]
      %v929 = vld [vmem:[#allocation11 + $0x70] sm:$0xff]
      %v930 = vld [vmem:[#allocation11 + $0x78] sm:$0xff]
      %v931 = vld [vmem:[#allocation11 + $0x80] sm:$0xff]
      %v932 = vld [vmem:[#allocation11 + $0x88] sm:$0xff]
      %v933 = vld [vmem:[#allocation11 + $0x90] sm:$0xff]
      %v934 = vld [vmem:[#allocation11 + $0x98] sm:$0xff]
      %v935 = vld [vmem:[#allocation11 + $0xa0] sm:$0xff]
      %v936 = vld [vmem:[#allocation11 + $0xa8] sm:$0xff]
      %v937 = vld [vmem:[#allocation11 + $0xb0] sm:$0xff]
      %v938 = vld [vmem:[#allocation11 + $0xb8] sm:$0xff]
      %v939 = vld [vmem:[#allocation11 + $0xc0] sm:$0xff]
      %v940 = vld [vmem:[#allocation11 + $0xc8] sm:$0xff]
      %v941 = vld [vmem:[#allocation11 + $0xd0] sm:$0xff]
      %v942 = vld [vmem:[#allocation11 + $0xd8] sm:$0xff]
      %v943 = vld [vmem:[#allocation11 + $0xe0] sm:$0xff]
      %v944 = vld [vmem:[#allocation11 + $0xe8] sm:$0xff]
      %v945 = vld [vmem:[#allocation11 + $0xf0] sm:$0xff]
      %v946 = vld [vmem:[#allocation11 + $0xf8] sm:$0xff]
      %v947 = vld [vmem:[#allocation13] sm:$0xff]
      %v948 = vld [vmem:[#allocation13 + $0x8] sm:$0xff]
      %v949 = vld [vmem:[#allocation13 + $0x10] sm:$0xff]
      %v950 = vld [vmem:[#allocation13 + $0x18] sm:$0xff]
      %v951 = vpack.c.bf16 %v882, %v882
      %v952 = vpack.c.bf16 %v190, %v190
      %v985 = vunpack.c.l.b16 %v915
      %v986 = vunpack.c.h.b16 %v915
      %v987 = vunpack.c.l.b16 %v916
      %v988 = vunpack.c.h.b16 %v916
      %v989 = vunpack.c.l.b16 %v917
      %v990 = vunpack.c.h.b16 %v917
      %v991 = vunpack.c.l.b16 %v918
      %v992 = vunpack.c.h.b16 %v918
      %v993 = vunpack.c.l.b16 %v919
      %v994 = vunpack.c.h.b16 %v919
      %v995 = vunpack.c.l.b16 %v920
      %v996 = vunpack.c.h.b16 %v920
      %v997 = vunpack.c.l.b16 %v921
      %v998 = vunpack.c.h.b16 %v921
      %v999 = vunpack.c.l.b16 %v922
      %v1000 = vunpack.c.h.b16 %v922
      %v1001 = vunpack.c.l.b16 %v923
      %v1002 = vunpack.c.h.b16 %v923
      %v1003 = vunpack.c.l.b16 %v924
      %v1004 = vunpack.c.h.b16 %v924
      %v1005 = vunpack.c.l.b16 %v925
      %v1006 = vunpack.c.h.b16 %v925
      %v1007 = vunpack.c.l.b16 %v926
      %v1008 = vunpack.c.h.b16 %v926
      %v1009 = vunpack.c.l.b16 %v927
      %v1010 = vunpack.c.h.b16 %v927
      %v1011 = vunpack.c.l.b16 %v928
      %v1012 = vunpack.c.h.b16 %v928
      %v1013 = vunpack.c.l.b16 %v929
      %v1014 = vunpack.c.h.b16 %v929
      %v1015 = vunpack.c.l.b16 %v930
      %v1016 = vunpack.c.h.b16 %v930
      %v1017 = vunpack.c.l.b16 %v931
      %v1018 = vunpack.c.h.b16 %v931
      %v1019 = vunpack.c.l.b16 %v932
      %v1020 = vunpack.c.h.b16 %v932
      %v1021 = vunpack.c.l.b16 %v933
      %v1022 = vunpack.c.h.b16 %v933
      %v1023 = vunpack.c.l.b16 %v934
      %v1024 = vunpack.c.h.b16 %v934
      %v1025 = vunpack.c.l.b16 %v935
      %v1026 = vunpack.c.h.b16 %v935
      %v1027 = vunpack.c.l.b16 %v936
      %v1028 = vunpack.c.h.b16 %v936
      %v1029 = vunpack.c.l.b16 %v937
      %v1030 = vunpack.c.h.b16 %v937
      %v1031 = vunpack.c.l.b16 %v938
      %v1032 = vunpack.c.h.b16 %v938
      %v1033 = vunpack.c.l.b16 %v939
      %v1034 = vunpack.c.h.b16 %v939
      %v1035 = vunpack.c.l.b16 %v940
      %v1036 = vunpack.c.h.b16 %v940
      %v1037 = vunpack.c.l.b16 %v941
      %v1038 = vunpack.c.h.b16 %v941
      %v1039 = vunpack.c.l.b16 %v942
      %v1040 = vunpack.c.h.b16 %v942
      %v1041 = vunpack.c.l.b16 %v943
      %v1042 = vunpack.c.h.b16 %v943
      %v1043 = vunpack.c.l.b16 %v944
      %v1044 = vunpack.c.h.b16 %v944
      %v1045 = vunpack.c.l.b16 %v945
      %v1046 = vunpack.c.h.b16 %v945
      %v1047 = vunpack.c.l.b16 %v946
      %v1048 = vunpack.c.h.b16 %v946
      %v1049 = vpack.c.b16 %v989, %v985
      %v1050 = vpack.c.b16 %v990, %v986
      %v1051 = vpack.c.b16 %v991, %v987
      %v1052 = vpack.c.b16 %v992, %v988
      %v1053 = vpack.c.b16 %v997, %v993
      %v1054 = vpack.c.b16 %v998, %v994
      %v1055 = vpack.c.b16 %v999, %v995
      %v1056 = vpack.c.b16 %v1000, %v996
      %v1057 = vpack.c.b16 %v1005, %v1001
      %v1058 = vpack.c.b16 %v1006, %v1002
      %v1059 = vpack.c.b16 %v1007, %v1003
      %v1060 = vpack.c.b16 %v1008, %v1004
      %v1061 = vpack.c.b16 %v1013, %v1009
      %v1062 = vpack.c.b16 %v1014, %v1010
      %v1063 = vpack.c.b16 %v1015, %v1011
      %v1064 = vpack.c.b16 %v1016, %v1012
      %v1065 = vpack.c.b16 %v1021, %v1017
      %v1066 = vpack.c.b16 %v1022, %v1018
      %v1067 = vpack.c.b16 %v1023, %v1019
      %v1068 = vpack.c.b16 %v1024, %v1020
      %v1069 = vpack.c.b16 %v1029, %v1025
      %v1070 = vpack.c.b16 %v1030, %v1026
      %v1071 = vpack.c.b16 %v1031, %v1027
      %v1072 = vpack.c.b16 %v1032, %v1028
      %v1073 = vpack.c.b16 %v1037, %v1033
      %v1074 = vpack.c.b16 %v1038, %v1034
      %v1075 = vpack.c.b16 %v1039, %v1035
      %v1076 = vpack.c.b16 %v1040, %v1036
      %v1077 = vpack.c.b16 %v1045, %v1041
      %v1078 = vpack.c.b16 %v1046, %v1042
      %v1079 = vpack.c.b16 %v1047, %v1043
      %v1080 = vpack.c.b16 %v1048, %v1044
      %1113 = vmatprep.subr.bf16.mxu0 %v1078
      %1114 = vmatpush1.bf16.msra.mxu0 %v1077
      %1115 = vmatprep.subr.bf16.mxu0 %v1074
      %1116 = vmatpush1.bf16.msra.mxu0 %v1073
      %1117 = vmatprep.subr.bf16.mxu0 %v1070
      %1118 = vmatpush1.bf16.msra.mxu0 %v1069
      %1119 = vmatprep.subr.bf16.mxu0 %v1066
      %1120 = vmatpush1.bf16.msra.mxu0 %v1065
      %1121 = vmatprep.subr.bf16.mxu0 %v1062
      %1122 = vmatpush1.bf16.msra.mxu0 %v1061
      %1123 = vmatprep.subr.bf16.mxu0 %v1058
      %1124 = vmatpush1.bf16.msra.mxu0 %v1057
      %1125 = vmatprep.subr.bf16.mxu0 %v1054
      %1126 = vmatpush1.bf16.msra.mxu0 %v1053
      %1127 = vmatprep.subr.bf16.mxu0 %v1050
      %1128 = vmatpush1.bf16.msra.mxu0 %v1049
      %1129 = vmatprep.subr.bf16.mxu0 0
      %1130 = vmatpush2.bf16.msra.mxu0 0
      %1131 = vmatprep.subr.bf16.mxu0 0
      %1132 = vmatpush2.bf16.msra.mxu0 0
      %1133 = vmatprep.subr.bf16.mxu0 0
      %1134 = vmatpush2.bf16.msra.mxu0 0
      %1135 = vmatprep.subr.bf16.mxu0 0
      %1136 = vmatpush2.bf16.msra.mxu0 0
      %1137 = vmatprep.subr.bf16.mxu0 0
      %1138 = vmatpush2.bf16.msra.mxu0 0
      %1139 = vmatprep.subr.bf16.mxu0 0
      %1140 = vmatpush2.bf16.msra.mxu0 0
      %1141 = vmatprep.subr.bf16.mxu0 0
      %1142 = vmatpush2.bf16.msra.mxu0 0
      %1143 = vmatprep.subr.bf16.mxu0 0
      %1144 = vmatpush2.bf16.msra.mxu0 0
      %1145 = vmatprep.mubr.bf16.mxu0 0
      %1146 = vmatmul.mubr.bf16.gmra.mxu0 %v952
      %v1147 = vpop.f32.mrf.mxu0
      %v1148 = vadd.f32 0.0, %v1147
      %v1149 = vpop.f32.mrf.mxu0
      %v1150 = vadd.f32 0.0, %v1149
      %v1151 = vpop.f32.mrf.mxu0
      %v1152 = vpop.f32.mrf.mxu0
      %1153 = vdwg.mxu0
      %1154 = vmatprep.subr.bf16.mxu0 %v1080
      %1155 = vmatpush1.bf16.msra.mxu0 %v1079
      %1156 = vmatprep.subr.bf16.mxu0 %v1076
      %1157 = vmatpush1.bf16.msra.mxu0 %v1075
      %1158 = vmatprep.subr.bf16.mxu0 %v1072
      %1159 = vmatpush1.bf16.msra.mxu0 %v1071
      %1160 = vmatprep.subr.bf16.mxu0 %v1068
      %1161 = vmatpush1.bf16.msra.mxu0 %v1067
      %1162 = vmatprep.subr.bf16.mxu0 %v1064
      %1163 = vmatpush1.bf16.msra.mxu0 %v1063
      %1164 = vmatprep.subr.bf16.mxu0 %v1060
      %1165 = vmatpush1.bf16.msra.mxu0 %v1059
      %1166 = vmatprep.subr.bf16.mxu0 %v1056
      %1167 = vmatpush1.bf16.msra.mxu0 %v1055
      %1168 = vmatprep.subr.bf16.mxu0 %v1052
      %1169 = vmatpush1.bf16.msra.mxu0 %v1051
      %1170 = vmatprep.subr.bf16.mxu0 0
      %1171 = vmatpush2.bf16.msra.mxu0 0
      %1172 = vmatprep.subr.bf16.mxu0 0
      %1173 = vmatpush2.bf16.msra.mxu0 0
      %1174 = vmatprep.subr.bf16.mxu0 0
      %1175 = vmatpush2.bf16.msra.mxu0 0
      %1176 = vmatprep.subr.bf16.mxu0 0
      %1177 = vmatpush2.bf16.msra.mxu0 0
      %1178 = vmatprep.subr.bf16.mxu0 0
      %1179 = vmatpush2.bf16.msra.mxu0 0
      %1180 = vmatprep.subr.bf16.mxu0 0
      %1181 = vmatpush2.bf16.msra.mxu0 0
      %1182 = vmatprep.subr.bf16.mxu0 0
      %1183 = vmatpush2.bf16.msra.mxu0 0
      %1184 = vmatprep.subr.bf16.mxu0 0
      %1185 = vmatpush2.bf16.msra.mxu0 0
      %1186 = vmatprep.mubr.bf16.mxu0 0
      %1187 = vmatmul.mubr.bf16.gmra.mxu0 %v952
      %v1188 = vpop.f32.mrf.mxu0
      %v1189 = vadd.f32 0.0, %v1188
      %v1190 = vpop.f32.mrf.mxu0
      %v1191 = vadd.f32 0.0, %v1190
      %v1192 = vpop.f32.mrf.mxu0
      %v1193 = vpop.f32.mrf.mxu0
      %1194 = vdwg.mxu0
      %v1227 = vunpack.c.l.b16 %v883
      %v1228 = vunpack.c.h.b16 %v883
      %v1229 = vunpack.c.l.b16 %v884
      %v1230 = vunpack.c.h.b16 %v884
      %v1231 = vunpack.c.l.b16 %v885
      %v1232 = vunpack.c.h.b16 %v885
      %v1233 = vunpack.c.l.b16 %v886
      %v1234 = vunpack.c.h.b16 %v886
      %v1235 = vunpack.c.l.b16 %v887
      %v1236 = vunpack.c.h.b16 %v887
      %v1237 = vunpack.c.l.b16 %v888
      %v1238 = vunpack.c.h.b16 %v888
      %v1239 = vunpack.c.l.b16 %v889
      %v1240 = vunpack.c.h.b16 %v889
      %v1241 = vunpack.c.l.b16 %v890
      %v1242 = vunpack.c.h.b16 %v890
      %v1243 = vunpack.c.l.b16 %v891
      %v1244 = vunpack.c.h.b16 %v891
      %v1245 = vunpack.c.l.b16 %v892
      %v1246 = vunpack.c.h.b16 %v892
      %v1247 = vunpack.c.l.b16 %v893
      %v1248 = vunpack.c.h.b16 %v893
      %v1249 = vunpack.c.l.b16 %v894
      %v1250 = vunpack.c.h.b16 %v894
      %v1251 = vunpack.c.l.b16 %v895
      %v1252 = vunpack.c.h.b16 %v895
      %v1253 = vunpack.c.l.b16 %v896
      %v1254 = vunpack.c.h.b16 %v896
      %v1255 = vunpack.c.l.b16 %v897
      %v1256 = vunpack.c.h.b16 %v897
      %v1257 = vunpack.c.l.b16 %v898
      %v1258 = vunpack.c.h.b16 %v898
      %v1259 = vunpack.c.l.b16 %v899
      %v1260 = vunpack.c.h.b16 %v899
      %v1261 = vunpack.c.l.b16 %v900
      %v1262 = vunpack.c.h.b16 %v900
      %v1263 = vunpack.c.l.b16 %v901
      %v1264 = vunpack.c.h.b16 %v901
      %v1265 = vunpack.c.l.b16 %v902
      %v1266 = vunpack.c.h.b16 %v902
      %v1267 = vunpack.c.l.b16 %v903
      %v1268 = vunpack.c.h.b16 %v903
      %v1269 = vunpack.c.l.b16 %v904
      %v1270 = vunpack.c.h.b16 %v904
      %v1271 = vunpack.c.l.b16 %v905
      %v1272 = vunpack.c.h.b16 %v905
      %v1273 = vunpack.c.l.b16 %v906
      %v1274 = vunpack.c.h.b16 %v906
      %v1275 = vunpack.c.l.b16 %v907
      %v1276 = vunpack.c.h.b16 %v907
      %v1277 = vunpack.c.l.b16 %v908
      %v1278 = vunpack.c.h.b16 %v908
      %v1279 = vunpack.c.l.b16 %v909
      %v1280 = vunpack.c.h.b16 %v909
      %v1281 = vunpack.c.l.b16 %v910
      %v1282 = vunpack.c.h.b16 %v910
      %v1283 = vunpack.c.l.b16 %v911
      %v1284 = vunpack.c.h.b16 %v911
      %v1285 = vunpack.c.l.b16 %v912
      %v1286 = vunpack.c.h.b16 %v912
      %v1287 = vunpack.c.l.b16 %v913
      %v1288 = vunpack.c.h.b16 %v913
      %v1289 = vunpack.c.l.b16 %v914
      %v1290 = vunpack.c.h.b16 %v914
      %v1291 = vpack.c.b16 %v1231, %v1227
      %v1292 = vpack.c.b16 %v1232, %v1228
      %v1293 = vpack.c.b16 %v1233, %v1229
      %v1294 = vpack.c.b16 %v1234, %v1230
      %v1295 = vpack.c.b16 %v1239, %v1235
      %v1296 = vpack.c.b16 %v1240, %v1236
      %v1297 = vpack.c.b16 %v1241, %v1237
      %v1298 = vpack.c.b16 %v1242, %v1238
      %v1299 = vpack.c.b16 %v1247, %v1243
      %v1300 = vpack.c.b16 %v1248, %v1244
      %v1301 = vpack.c.b16 %v1249, %v1245
      %v1302 = vpack.c.b16 %v1250, %v1246
      %v1303 = vpack.c.b16 %v1255, %v1251
      %v1304 = vpack.c.b16 %v1256, %v1252
      %v1305 = vpack.c.b16 %v1257, %v1253
      %v1306 = vpack.c.b16 %v1258, %v1254
      %v1307 = vpack.c.b16 %v1263, %v1259
      %v1308 = vpack.c.b16 %v1264, %v1260
      %v1309 = vpack.c.b16 %v1265, %v1261
      %v1310 = vpack.c.b16 %v1266, %v1262
      %v1311 = vpack.c.b16 %v1271, %v1267
      %v1312 = vpack.c.b16 %v1272, %v1268
      %v1313 = vpack.c.b16 %v1273, %v1269
      %v1314 = vpack.c.b16 %v1274, %v1270
      %v1315 = vpack.c.b16 %v1279, %v1275
      %v1316 = vpack.c.b16 %v1280, %v1276
      %v1317 = vpack.c.b16 %v1281, %v1277
      %v1318 = vpack.c.b16 %v1282, %v1278
      %v1319 = vpack.c.b16 %v1287, %v1283
      %v1320 = vpack.c.b16 %v1288, %v1284
      %v1321 = vpack.c.b16 %v1289, %v1285
      %v1322 = vpack.c.b16 %v1290, %v1286
      %1355 = vmatprep.subr.bf16.mxu0 %v1320
      %1356 = vmatpush1.bf16.msra.mxu0 %v1319
      %1357 = vmatprep.subr.bf16.mxu0 %v1316
      %1358 = vmatpush1.bf16.msra.mxu0 %v1315
      %1359 = vmatprep.subr.bf16.mxu0 %v1312
      %1360 = vmatpush1.bf16.msra.mxu0 %v1311
      %1361 = vmatprep.subr.bf16.mxu0 %v1308
      %1362 = vmatpush1.bf16.msra.mxu0 %v1307
      %1363 = vmatprep.subr.bf16.mxu0 %v1304
      %1364 = vmatpush1.bf16.msra.mxu0 %v1303
      %1365 = vmatprep.subr.bf16.mxu0 %v1300
      %1366 = vmatpush1.bf16.msra.mxu0 %v1299
      %1367 = vmatprep.subr.bf16.mxu0 %v1296
      %1368 = vmatpush1.bf16.msra.mxu0 %v1295
      %1369 = vmatprep.subr.bf16.mxu0 %v1292
      %1370 = vmatpush1.bf16.msra.mxu0 %v1291
      %1371 = vmatprep.subr.bf16.mxu0 0
      %1372 = vmatpush2.bf16.msra.mxu0 0
      %1373 = vmatprep.subr.bf16.mxu0 0
      %1374 = vmatpush2.bf16.msra.mxu0 0
      %1375 = vmatprep.subr.bf16.mxu0 0
      %1376 = vmatpush2.bf16.msra.mxu0 0
      %1377 = vmatprep.subr.bf16.mxu0 0
      %1378 = vmatpush2.bf16.msra.mxu0 0
      %1379 = vmatprep.subr.bf16.mxu0 0
      %1380 = vmatpush2.bf16.msra.mxu0 0
      %1381 = vmatprep.subr.bf16.mxu0 0
      %1382 = vmatpush2.bf16.msra.mxu0 0
      %1383 = vmatprep.subr.bf16.mxu0 0
      %1384 = vmatpush2.bf16.msra.mxu0 0
      %1385 = vmatprep.subr.bf16.mxu0 0
      %1386 = vmatpush2.bf16.msra.mxu0 0
      %1387 = vmatprep.mubr.bf16.mxu0 0
      %1388 = vmatmul.mubr.bf16.gmra.mxu0 %v951
      %v1389 = vpop.f32.mrf.mxu0
      %v1390 = vadd.f32 %v1148, %v1389
      %v1391 = vpop.f32.mrf.mxu0
      %v1392 = vadd.f32 %v1150, %v1391
      %v1393 = vpop.f32.mrf.mxu0
      %v1394 = vpop.f32.mrf.mxu0
      %1395 = vdwg.mxu0
      %1396 = vmatprep.subr.bf16.mxu0 %v1322
      %1397 = vmatpush1.bf16.msra.mxu0 %v1321
      %1398 = vmatprep.subr.bf16.mxu0 %v1318
      %1399 = vmatpush1.bf16.msra.mxu0 %v1317
      %1400 = vmatprep.subr.bf16.mxu0 %v1314
      %1401 = vmatpush1.bf16.msra.mxu0 %v1313
      %1402 = vmatprep.subr.bf16.mxu0 %v1310
      %1403 = vmatpush1.bf16.msra.mxu0 %v1309
      %1404 = vmatprep.subr.bf16.mxu0 %v1306
      %1405 = vmatpush1.bf16.msra.mxu0 %v1305
      %1406 = vmatprep.subr.bf16.mxu0 %v1302
      %1407 = vmatpush1.bf16.msra.mxu0 %v1301
      %1408 = vmatprep.subr.bf16.mxu0 %v1298
      %1409 = vmatpush1.bf16.msra.mxu0 %v1297
      %1410 = vmatprep.subr.bf16.mxu0 %v1294
      %1411 = vmatpush1.bf16.msra.mxu0 %v1293
      %1412 = vmatprep.subr.bf16.mxu0 0
      %1413 = vmatpush2.bf16.msra.mxu0 0
      %1414 = vmatprep.subr.bf16.mxu0 0
      %1415 = vmatpush2.bf16.msra.mxu0 0
      %1416 = vmatprep.subr.bf16.mxu0 0
      %1417 = vmatpush2.bf16.msra.mxu0 0
      %1418 = vmatprep.subr.bf16.mxu0 0
      %1419 = vmatpush2.bf16.msra.mxu0 0
      %1420 = vmatprep.subr.bf16.mxu0 0
      %1421 = vmatpush2.bf16.msra.mxu0 0
      %1422 = vmatprep.subr.bf16.mxu0 0
      %1423 = vmatpush2.bf16.msra.mxu0 0
      %1424 = vmatprep.subr.bf16.mxu0 0
      %1425 = vmatpush2.bf16.msra.mxu0 0
      %1426 = vmatprep.subr.bf16.mxu0 0
      %1427 = vmatpush2.bf16.msra.mxu0 0
      %1428 = vmatprep.mubr.bf16.mxu0 0
      %1429 = vmatmul.mubr.bf16.gmra.mxu0 %v951
      %v1430 = vpop.f32.mrf.mxu0
      %v1431 = vadd.f32 %v1189, %v1430
      %v1432 = vpop.f32.mrf.mxu0
      %v1433 = vadd.f32 %v1191, %v1432
      %v1434 = vpop.f32.mrf.mxu0
      %v1435 = vpop.f32.mrf.mxu0
      %1436 = vdwg.mxu0
      %v1437 = vadd.f32 %v1390, %v947
      %v1438 = vadd.f32 %v1392, %v948
      %v1439 = vadd.f32 %v1431, %v949
      %v1440 = vadd.f32 %v1433, %v950
      %v1441 = vxor.u32 %v1437, 2147483648
      %v1442 = vmul.f32 %v1441, 1.442695
      %v1443 = vpow.pop %v1442
      %v1444 = vadd.f32 %v1443, 1.0
      %v1445 = vrcp.pop %v1444
      %v1446 = vmul.f32 1.0, %v1445
      %v1447 = vxor.u32 %v1438, 2147483648
      %v1448 = vmul.f32 %v1447, 1.442695
      %v1449 = vpow.pop %v1448
      %v1450 = vadd.f32 %v1449, 1.0
      %v1451 = vrcp.pop %v1450
      %v1452 = vmul.f32 1.0, %v1451
      %v1453 = vtanh.pop %v1439
      %v1454 = vxor.u32 %v1440, 2147483648
      %v1455 = vmul.f32 %v1454, 1.442695
      %v1456 = vpow.pop %v1455
      %v1457 = vadd.f32 %v1456, 1.0
      %v1458 = vrcp.pop %v1457
      %v1459 = vmul.f32 1.0, %v1458
      %v1460 = vmul.f32 %v1452, %v192
      %v1461 = vmul.f32 %v1446, %v1453
      %v1462 = vadd.f32 %v1460, %v1461
      %v1463 = vtanh.pop %v1462
      %v1464 = vmul.f32 %v1459, %v1463
      %v1465 = vpack.c.bf16 %v1464, %v1464
      %v1466 = vld [vmem:[#allocation14] sm:$0xf]
      %v1467 = vld [vmem:[#allocation14 + $0x4] sm:$0xf]
      %v1468 = vld [vmem:[#allocation14 + $0x8] sm:$0xf]
      %v1469 = vld [vmem:[#allocation14 + $0xc] sm:$0xf]
      %v1470 = vld [vmem:[#allocation14 + $0x10] sm:$0xf]
      %v1471 = vld [vmem:[#allocation14 + $0x14] sm:$0xf]
      %v1472 = vld [vmem:[#allocation14 + $0x18] sm:$0xf]
      %v1473 = vld [vmem:[#allocation14 + $0x1c] sm:$0xf]
      %v1474 = vld [vmem:[#allocation14 + $0x20] sm:$0xf]
      %v1475 = vld [vmem:[#allocation14 + $0x24] sm:$0xf]
      %v1476 = vld [vmem:[#allocation14 + $0x28] sm:$0xf]
      %v1477 = vld [vmem:[#allocation14 + $0x2c] sm:$0xf]
      %v1478 = vld [vmem:[#allocation14 + $0x30] sm:$0xf]
      %v1479 = vld [vmem:[#allocation14 + $0x34] sm:$0xf]
      %v1480 = vld [vmem:[#allocation14 + $0x38] sm:$0xf]
      %v1481 = vld [vmem:[#allocation14 + $0x3c] sm:$0xf]
      %v1482 = vld [vmem:[#allocation16] sm:$0xff]
      %v1499 = vunpack.c.l.b16 %v1466
      %v1500 = vunpack.c.l.b16 %v1467
      %v1501 = vunpack.c.l.b16 %v1468
      %v1502 = vunpack.c.l.b16 %v1469
      %v1503 = vunpack.c.l.b16 %v1470
      %v1504 = vunpack.c.l.b16 %v1471
      %v1505 = vunpack.c.l.b16 %v1472
      %v1506 = vunpack.c.l.b16 %v1473
      %v1507 = vunpack.c.l.b16 %v1474
      %v1508 = vunpack.c.l.b16 %v1475
      %v1509 = vunpack.c.l.b16 %v1476
      %v1510 = vunpack.c.l.b16 %v1477
      %v1511 = vunpack.c.l.b16 %v1478
      %v1512 = vunpack.c.l.b16 %v1479
      %v1513 = vunpack.c.l.b16 %v1480
      %v1514 = vunpack.c.l.b16 %v1481
      %v1515 = vpack.c.b16 %v1500, %v1499
      %v1516 = vpack.c.b16 %v1502, %v1501
      %v1517 = vpack.c.b16 %v1504, %v1503
      %v1518 = vpack.c.b16 %v1506, %v1505
      %v1519 = vpack.c.b16 %v1508, %v1507
      %v1520 = vpack.c.b16 %v1510, %v1509
      %v1521 = vpack.c.b16 %v1512, %v1511
      %v1522 = vpack.c.b16 %v1514, %v1513
      %1531 = vmatprep.subr.bf16.mxu0 0
      %1532 = vmatpush1.bf16.msra.mxu0 %v1522
      %1533 = vmatprep.subr.bf16.mxu0 0
      %1534 = vmatpush1.bf16.msra.mxu0 %v1521
      %1535 = vmatprep.subr.bf16.mxu0 0
      %1536 = vmatpush1.bf16.msra.mxu0 %v1520
      %1537 = vmatprep.subr.bf16.mxu0 0
      %1538 = vmatpush1.bf16.msra.mxu0 %v1519
      %1539 = vmatprep.subr.bf16.mxu0 0
      %1540 = vmatpush1.bf16.msra.mxu0 %v1518
      %1541 = vmatprep.subr.bf16.mxu0 0
      %1542 = vmatpush1.bf16.msra.mxu0 %v1517
      %1543 = vmatprep.subr.bf16.mxu0 0
      %1544 = vmatpush1.bf16.msra.mxu0 %v1516
      %1545 = vmatprep.subr.bf16.mxu0 0
      %1546 = vmatpush1.bf16.msra.mxu0 %v1515
      %1547 = vmatprep.subr.bf16.mxu0 0
      %1548 = vmatpush2.bf16.msra.mxu0 0
      %1549 = vmatprep.subr.bf16.mxu0 0
      %1550 = vmatpush2.bf16.msra.mxu0 0
      %1551 = vmatprep.subr.bf16.mxu0 0
      %1552 = vmatpush2.bf16.msra.mxu0 0
      %1553 = vmatprep.subr.bf16.mxu0 0
      %1554 = vmatpush2.bf16.msra.mxu0 0
      %1555 = vmatprep.subr.bf16.mxu0 0
      %1556 = vmatpush2.bf16.msra.mxu0 0
      %1557 = vmatprep.subr.bf16.mxu0 0
      %1558 = vmatpush2.bf16.msra.mxu0 0
      %1559 = vmatprep.subr.bf16.mxu0 0
      %1560 = vmatpush2.bf16.msra.mxu0 0
      %1561 = vmatprep.subr.bf16.mxu0 0
      %1562 = vmatpush2.bf16.msra.mxu0 0
      %1563 = vmatprep.mubr.bf16.mxu0 0
      %1564 = vmatmul.mubr.bf16.gmra.mxu0 %v1465
      %v1565 = vpop.f32.mrf.mxu0
      %v1566 = vadd.f32 %v1482, %v1565
      %v1567 = vpop.f32.mrf.mxu0
      %v1568 = vpop.f32.mrf.mxu0
      %v1569 = vpop.f32.mrf.mxu0
      %1570 = vdwg.mxu0
      %s1571 = ssub.s32 %s184, 1
      %s1572 = smul.u32 %s1571, 8
      %s1573 = scalar_lea.vmem [#allocation19], %s1572
      %1574 = vst [vmem:[%s1573] sm:$0xff] %v1566
      %1575 = vmax.index.xlane.f32.xlu0 %v1566
      %v1576 = vpop.xlane.xlu0 %1575
      %s1577 = scalar_lea.vmem %s12, %s1572
      %vm1578 = vcmask 7168
      %1579 = vst.msk [vmem:[%s1577] sm:$0xff] %vm1578, %v1576
    $region90: #{tpu_custom_call.1} parent=1 // loop_footer
      %s188 = sadd.s32 1, %s184
    $region91: #{tpu_custom_call.1} parent=1 // loop_footer_branch
      %183 = sbr.rel target = $region87
    $region92: #{tpu_custom_call.1} parent=1 // loop_exit
      _
    %1580 = vst [vmem:[#allocation20] sm:$0xff] %v189
    %1581 = vst [vmem:[#allocation22] sm:$0xff] %v191
    %s1582 = scalar_lea.vmem [#allocation20], 8
    %1583 = vst [vmem:[%s1582] sm:$0xff] %v190
    %s1584 = scalar_lea.vmem [#allocation22], 8
    %1585 = vst [vmem:[%s1584] sm:$0xff] %v192
    // Predicated region
    $region93: #{tpu_custom_call.1} parent=1 // pred_check
      _
    $region94: #{tpu_custom_call.1} parent=1 // pred_check_branch
      %1587 = sbr.rel (0) target = $region96
    $region95: #{tpu_custom_call.1} parent=1 // pred_region
      %s1589 = ssub.s32 896, 896
      %1590 = vsyncadd [#allocation4], %s1589
      %s1591 = sshll.u32 [#allocation19], 4
      %s1592 = int_to_ptr.vmem [resolvable:$true] %s1591
      %1597 = dma.vmem_to_hbm [thread:$0]  %s1592, 896, %s11, [#allocation4], 128, 128, 8
    $region96: #{tpu_custom_call.1} parent=1 // pred_fallthru
      _
    // Predicated region
    $region97: #{tpu_custom_call.1} parent=1 // pred_check
      _
    $region98: #{tpu_custom_call.1} parent=1 // pred_check_branch
      %1599 = sbr.rel (0) target = $region100
    $region99: #{tpu_custom_call.1} parent=1 // pred_region
      _
    $region100: #{tpu_custom_call.1} parent=1 // pred_fallthru
      _
    // Predicated region
    $region101: #{tpu_custom_call.1} parent=1 // pred_check
      _
    $region102: #{tpu_custom_call.1} parent=1 // pred_check_branch
      %1601 = sbr.rel (0) target = $region104
    $region103: #{tpu_custom_call.1} parent=1 // pred_region
      %s1603 = ssub.s32 256, 256
      %1604 = vsyncadd [#allocation21], %s1603
      %s1605 = sshll.u32 [#allocation20], 4
      %s1606 = int_to_ptr.vmem [resolvable:$true] %s1605
      %1611 = dma.vmem_to_hbm [thread:$0]  %s1606, 256, %s13, [#allocation21], 128, 128, 8
    $region104: #{tpu_custom_call.1} parent=1 // pred_fallthru
      _
    // Predicated region
    $region105: #{tpu_custom_call.1} parent=1 // pred_check
      _
    $region106: #{tpu_custom_call.1} parent=1 // pred_check_branch
      %1613 = sbr.rel (0) target = $region108
    $region107: #{tpu_custom_call.1} parent=1 // pred_region
      %s1615 = ssub.s32 256, 256
      %1616 = vsyncadd [#allocation21], %s1615
      %s1617 = sshll.u32 [#allocation22], 4
      %s1618 = int_to_ptr.vmem [resolvable:$true] %s1617
      %1623 = dma.vmem_to_hbm [thread:$0]  %s1618, 256, %s14, [#allocation21], 128, 128, 8
    $region108: #{tpu_custom_call.1} parent=1 // pred_fallthru
      _
    // Predicated region
    $region109: #{tpu_custom_call.1} parent=1 // pred_check
      _
    $region110: #{tpu_custom_call.1} parent=1 // pred_check_branch
      %1625 = sbr.rel (0) target = $region112
    $region111: #{tpu_custom_call.1} parent=1 // pred_region
      %1626 = dma.done [#allocation4], 896
    $region112: #{tpu_custom_call.1} parent=1 // pred_fallthru
      _
    // Predicated region
    $region113: #{tpu_custom_call.1} parent=1 // pred_check
      _
    $region114: #{tpu_custom_call.1} parent=1 // pred_check_branch
      %1628 = sbr.rel (0) target = $region116
    $region115: #{tpu_custom_call.1} parent=1 // pred_region
      _
    $region116: #{tpu_custom_call.1} parent=1 // pred_fallthru
      _
    // Predicated region
    $region117: #{tpu_custom_call.1} parent=1 // pred_check
      _
    $region118: #{tpu_custom_call.1} parent=1 // pred_check_branch
      %1630 = sbr.rel (0) target = $region120
    $region119: #{tpu_custom_call.1} parent=1 // pred_region
      %1631 = dma.done [#allocation21], 256
    $region120: #{tpu_custom_call.1} parent=1 // pred_fallthru
      _
    // Predicated region
    $region121: #{tpu_custom_call.1} parent=1 // pred_check
      _
    $region122: #{tpu_custom_call.1} parent=1 // pred_check_branch
      %1633 = sbr.rel (0) target = $region124
    $region123: #{tpu_custom_call.1} parent=1 // pred_region
      %1634 = dma.done [#allocation21], 256
    $region124: #{tpu_custom_call.1} parent=1 // pred_fallthru
      _
    %1635 = vsyncpa [#allocation3], 1
    %1636 = vsyncpa [#allocation6], 1
    %1637 = vsyncpa [#allocation9], 1
    %1638 = vsyncpa [#allocation12], 1
    %1639 = vsyncpa [#allocation15], 1
    %1640 = vsyncpa [#allocation18], 1
    %1641 = vsyncpa [#allocation4], 1
    %1642 = vsyncpa [#allocation21], 1

</llo_original>
